<compile_context>
chip_gen: v7x
topology: tpu7x:2x2x1
jax: 0.10.0
libtpu: 0.0.40
codegen_flags: <defaults>
</compile_context>

<pallas_src>
import jax
import jax.numpy as jnp
from jax.experimental import pallas as pl
from jax.experimental.pallas import tpu as pltpu


def _round_up(x, m):
    return ((x + m - 1) // m) * m


# ----------------------------------------------------------------------------
# Pallas kernels
# ----------------------------------------------------------------------------
def _conv_mm_kernel(p_ref, w_ref, o_ref, stat_ref, acc_ref):
    """(tm x tn) output tile, accumulated over the K grid axis (innermost).

    Epilogue on the last K step: cast the f32 accumulator to the bf16 output
    and emit per-channel partial [sum, sum-of-squares] for BatchNorm stats.
    """
    @pl.when(pl.program_id(2) == 0)
    def _init():
        acc_ref[...] = jnp.zeros_like(acc_ref)

    acc_ref[...] += jnp.dot(p_ref[...], w_ref[...],
                            preferred_element_type=jnp.float32)

    @pl.when(pl.program_id(2) == pl.num_programs(2) - 1)
    def _finalize():
        acc = acc_ref[...]
        o_ref[...] = acc.astype(o_ref.dtype)
        stats = jnp.concatenate(
            [jnp.sum(acc, axis=0, keepdims=True),
             jnp.sum(acc * acc, axis=0, keepdims=True)], axis=0)   # (2, tn)
        stat_ref[...] = stats.reshape(stat_ref.shape)


def _bn_leaky_kernel(x_ref, s_ref, b_ref, o_ref):
    y = x_ref[...].astype(jnp.float32) * s_ref[...] + b_ref[...]
    o_ref[...] = jnp.where(y > 0, y, 0.1 * y).astype(o_ref.dtype)


def _bn_leaky_res_kernel(x_ref, s_ref, b_ref, r_ref, o_ref):
    y = x_ref[...].astype(jnp.float32) * s_ref[...] + b_ref[...]
    y = jnp.where(y > 0, y, 0.1 * y)
    o_ref[...] = (y + r_ref[...].astype(jnp.float32)).astype(o_ref.dtype)


# ----------------------------------------------------------------------------
# Pallas wrappers
# ----------------------------------------------------------------------------
def _pick_tn(cout):
    if cout % 256 == 0:
        return 256
    if cout % 128 == 0:
        return 128
    return cout                      # small Cout (32/64): full-dim block


def _pick_tk(k_pad):
    if k_pad <= 512:
        return k_pad
    for cand in (512, 384, 256, 128):
        if k_pad % cand == 0:
            return cand
    return k_pad                     # unreachable: k_pad is a multiple of 128


def pallas_conv_matmul(patches, w_mat):
    """bf16 [M, K] @ bf16 [K, Cout] -> (bf16 [M_pad, Cout], f32 stats [2, Cout]).

    Tiled over (M, Cout, K) with an f32 accumulator; per-channel sum and
    sum-of-squares are a fused epilogue (partial per M tile, reduced outside).
    Zero-padding of M/K rows/cols contributes exactly zero to both the matmul
    and the statistics.
    """
    M, K = patches.shape
    Cout = w_mat.shape[1]

    tm = 512 if M >= 512 else _round_up(M, 16)     # fixed big tiles where possible
    M_pad = _round_up(M, tm)
    tn = _pick_tn(Cout)
    K_pad = _round_up(K, 128)
    tk = _pick_tk(K_pad)

    if (M_pad, K_pad) != (M, K):
        patches = jnp.pad(patches, ((0, M_pad - M), (0, K_pad - K)))
    if K_pad != K:
        w_mat = jnp.pad(w_mat, ((0, K_pad - K), (0, 0)))

    ni, nj, nk = M_pad // tm, Cout // tn, K_pad // tk

    conv, stat_part = pl.pallas_call(
        _conv_mm_kernel,
        out_shape=(jax.ShapeDtypeStruct((M_pad, Cout), jnp.bfloat16),
                   jax.ShapeDtypeStruct((ni, 2, Cout), jnp.float32)),
        grid=(ni, nj, nk),
        in_specs=[pl.BlockSpec((tm, tk), lambda i, j, k: (i, k)),
                  pl.BlockSpec((tk, tn), lambda i, j, k: (k, j))],
        out_specs=(pl.BlockSpec((tm, tn), lambda i, j, k: (i, j)),
                   pl.BlockSpec((1, 2, tn), lambda i, j, k: (i, 0, j))),
        scratch_shapes=[pltpu.VMEM((tm, tn), jnp.float32)],
        compiler_params=pltpu.CompilerParams(
            dimension_semantics=("parallel", "parallel", "arbitrary")),
    )(patches, w_mat)

    stats = jnp.sum(stat_part, axis=0)             # (2, Cout): [sum, sum_sq]
    return conv, stats


def pallas_bn_leaky(x_pad, scale, bias, residual_pad=None):
    """Fused per-channel affine (folded BN) + LeakyReLU(0.1) [+ residual].

    Tiled over M (512-row blocks) so large activations never need to fit VMEM
    and the grid can be megacore-sharded.
    """
    M_pad, C = x_pad.shape
    tile_m = min(512, M_pad)                       # M_pad is a multiple of tile_m
    grid = (M_pad // tile_m,)
    s = scale.reshape(1, C).astype(jnp.float32)
    b = bias.reshape(1, C).astype(jnp.float32)
    blk = pl.BlockSpec((tile_m, C), lambda i: (i, 0))
    row = pl.BlockSpec((1, C), lambda i: (0, 0))
    cparams = pltpu.CompilerParams(dimension_semantics=("parallel",))
    if residual_pad is None:
        return pl.pallas_call(
            _bn_leaky_kernel,
            out_shape=jax.ShapeDtypeStruct((M_pad, C), jnp.bfloat16),
            grid=grid,
            in_specs=[blk, row, row],
            out_specs=blk,
            compiler_params=cparams,
        )(x_pad, s, b)
    return pl.pallas_call(
        _bn_leaky_res_kernel,
        out_shape=jax.ShapeDtypeStruct((M_pad, C), jnp.bfloat16),
        grid=grid,
        in_specs=[blk, row, row, blk],
        out_specs=blk,
        compiler_params=cparams,
    )(x_pad, s, b, residual_pad)


# ----------------------------------------------------------------------------
# Conv / ResBlock / DarkNet53 (glue: im2col, BN batch statistics, reshapes)
# ----------------------------------------------------------------------------
def _im2col(x, k, stride, pad):
    """x: [N, H, W, C] -> patches [N*Ho*Wo, k*k*C] (order: kh, kw, C)."""
    # TODO(synk): fuse this gather into the matmul kernel (shifted-window
    # index_map / manual DMA over the k*k taps) to avoid materializing the
    # k*k-expanded patch tensor in HBM; bf16 patches halve that traffic now.
    N, H, W, C = x.shape
    if pad:
        x = jnp.pad(x, ((0, 0), (pad, pad), (pad, pad), (0, 0)))
    Hp, Wp = H + 2 * pad, W + 2 * pad
    Ho = (Hp - k) // stride + 1
    Wo = (Wp - k) // stride + 1
    cols = []
    for di in range(k):
        for dj in range(k):
            cols.append(x[:, di:di + stride * Ho:stride,
                          dj:dj + stride * Wo:stride, :])
    patches = jnp.concatenate(cols, axis=-1)       # [N, Ho, Wo, k*k*C]
    return patches.reshape(N * Ho * Wo, k * k * C), Ho, Wo


def conv_bn_leaky(x, p, residual=None):
    """PyTorch `Conv` block: Conv2d(bias=False) -> BatchNorm2d -> LeakyReLU(0.1)."""
    N, H, W, Cin = x.shape
    k, stride = p['k'], p['stride']
    pad = (k - 1) // 2 if k else 0
    patches, Ho, Wo = _im2col(x.astype(jnp.bfloat16), k, stride, pad)
    M = N * Ho * Wo
    Cout = p['w'].shape[-1]
    w_mat = p['w'].reshape(k * k * Cin, Cout).astype(jnp.bfloat16)

    conv, stats = pallas_conv_matmul(patches, w_mat)   # bf16 [M_pad, Cout]
    M_pad = conv.shape[0]

    # nn.BatchNorm2d in (default) training mode: biased batch statistics from
    # the f32 matmul accumulator (padded rows contribute zero; divide by true M).
    # TODO(synk): running_mean/var momentum updates are a training-only side
    # effect that does not change the forward output; not reproduced.
    mean = stats[0] / M
    var = jnp.maximum(stats[1] / M - mean * mean, 0.0)
    scale = p['gamma'] / jnp.sqrt(var + 1e-5)
    bias = p['beta'] - mean * scale

    res_pad = None
    if residual is not None:
        res_pad = residual.astype(jnp.bfloat16).reshape(M, Cout)
        if M_pad != M:
            res_pad = jnp.pad(res_pad, ((0, M_pad - M), (0, 0)))

    y = pallas_bn_leaky(conv, scale, bias, res_pad)    # bf16 [M_pad, Cout]
    return y[:M].reshape(N, Ho, Wo, Cout)


def resblock(x, p1, p2):
    y = conv_bn_leaky(x, p1)                       # 1x1, Cout -> Cin
    y = conv_bn_leaky(y, p2, residual=x)           # 3x3, Cin -> Cout, +residual
    return y


def darknet53_forward(params, x_nchw):
    x = jnp.transpose(x_nchw, (0, 2, 3, 1)).astype(jnp.bfloat16)   # NCHW -> NHWC
    x = conv_bn_leaky(x, params['conv0'])
    outs = []
    for li in range(1, 6):
        layer = params[f'layer{li}']
        x = conv_bn_leaky(x, layer['down'])        # 3x3 stride-2 downsample
        for (p1, p2) in layer['blocks']:
            x = resblock(x, p1, p2)
        outs.append(x)
    to_nchw = lambda t: jnp.transpose(t, (0, 3, 1, 2)).astype(jnp.float32)
    return to_nchw(outs[2]), to_nchw(outs[3]), to_nchw(outs[4])


# ----------------------------------------------------------------------------
# Deterministic parameter initialization (synthetic weights)
# ----------------------------------------------------------------------------
def init_conv(key, cin, cout, k, stride):
    kw, kg, kb = jax.random.split(key, 3)
    fan_in = cin * k * k
    # weight stored as [kh, kw, Cin, Cout] (matches im2col K ordering)
    w = jax.random.normal(kw, (k, k, cin, cout), jnp.float32) / jnp.sqrt(fan_in)
    gamma = 1.0 + 0.1 * jax.random.normal(kg, (cout,), jnp.float32)
    beta = 0.05 * jax.random.normal(kb, (cout,), jnp.float32)
    return {'w': w, 'gamma': gamma, 'beta': beta, 'k': k, 'stride': stride}


def init_layer(key, cin, cout, nblocks):
    keys = jax.random.split(key, 1 + 2 * nblocks)
    down = init_conv(keys[0], cin, cout, 3, 2)
    blocks = []
    for i in range(nblocks):
        p1 = init_conv(keys[1 + 2 * i], cout, cin, 1, 1)
        p2 = init_conv(keys[2 + 2 * i], cin, cout, 3, 1)
        blocks.append((p1, p2))
    return {'down': down, 'blocks': blocks}


def init_darknet53(key):
    keys = jax.random.split(key, 6)
    return {
        'conv0': init_conv(keys[0], 3, 32, 3, 1),
        'layer1': init_layer(keys[1], 32, 64, 1),
        'layer2': init_layer(keys[2], 64, 128, 2),
        'layer3': init_layer(keys[3], 128, 256, 8),
        'layer4': init_layer(keys[4], 256, 512, 8),
        'layer5': init_layer(keys[5], 512, 1024, 4),
    }


if __name__ == "__main__":
    root = jax.random.PRNGKey(0)
    kx, kp = jax.random.split(root)
    # NCHW input, like the PyTorch module (3 input channels fixed by the arch).
    x = jax.random.normal(kx, (2, 3, 32, 32), jnp.float32)
    params = init_darknet53(kp)

    out3, out4, out5 = darknet53_forward(params, x)
    jax.block_until_ready((out3, out4, out5))

    assert out3.shape == (2, 256, 4, 4)
    assert out4.shape == (2, 512, 2, 2)
    assert out5.shape == (2, 1024, 1, 1)
    assert out3.dtype == out4.dtype == out5.dtype == jnp.float32
    assert bool(jnp.all(jnp.isfinite(out3)))
    assert bool(jnp.all(jnp.isfinite(out4)))
    assert bool(jnp.all(jnp.isfinite(out5)))
    print("KERNEL_OK")
</pallas_src>

<mosaic_0001>
module attributes {stable_mosaic.version = 11 : i64} {
  func.func @_conv_mm_kernel(%arg0: i32, %arg1: i32, %arg2: i32, %arg3: memref<512x128xbf16, #tpu.memory_space<vmem>>, %arg4: memref<128x32xbf16, #tpu.memory_space<vmem>>, %arg5: memref<512x32xbf16, #tpu.memory_space<vmem>>, %arg6: memref<1x2x32xf32, #tpu.memory_space<vmem>>, %arg7: memref<512x32xf32, #tpu.memory_space<vmem>>) attributes {dimension_semantics = [#tpu.dimension_semantics<parallel>, #tpu.dimension_semantics<parallel>, #tpu.dimension_semantics<arbitrary>], iteration_bounds = array<i64: 4, 1, 1>, scalar_prefetch = 0 : i64, scratch_operands = 1 : i64, tpu.core_type = #tpu.core_type<tc>, window_params = [{transform_indices = @transform_0, window_bounds = array<i64: 512, 128>}, {transform_indices = @transform_1, window_bounds = array<i64: 128, 32>}, {transform_indices = @transform_2, window_bounds = array<i64: 512, 32>}, {transform_indices = @transform_3, window_bounds = array<i64: 1, 2, 32>}]} {
    %c0_i32 = arith.constant 0 : i32
    %0 = arith.cmpi eq, %arg2, %c0_i32 : i32
    %1 = arith.extui %0 : i1 to i32
    %c0_i32_0 = arith.constant 0 : i32
    %2 = arith.cmpi ne, %1, %c0_i32_0 : i32
    scf.if %2 {
      %cst_10 = arith.constant 0.000000e+00 : f32
      %12 = vector.broadcast %cst_10 : f32 to vector<512x32xf32>
      %c0_11 = arith.constant 0 : index
      %c0_12 = arith.constant 0 : index
      %13 = vector.load %arg7[%c0_11, %c0_12] : memref<512x32xf32, #tpu.memory_space<vmem>>, vector<512x32xf32>
      tpu.vector_store %arg7[%c0_11, %c0_12], %12 {strides = array<i32>} : memref<512x32xf32, #tpu.memory_space<vmem>>, vector<512x32xf32>,
    } else {
    }
    %c0 = arith.constant 0 : index
    %c0_1 = arith.constant 0 : index
    %3 = vector.load %arg7[%c0, %c0_1] : memref<512x32xf32, #tpu.memory_space<vmem>>, vector<512x32xf32>
    %c0_2 = arith.constant 0 : index
    %c0_3 = arith.constant 0 : index
    %4 = vector.load %arg3[%c0_2, %c0_3] : memref<512x128xbf16, #tpu.memory_space<vmem>>, vector<512x128xbf16>
    %c0_4 = arith.constant 0 : index
    %c0_5 = arith.constant 0 : index
    %5 = vector.load %arg4[%c0_4, %c0_5] : memref<128x32xbf16, #tpu.memory_space<vmem>>, vector<128x32xbf16>
    %cst = arith.constant dense<0.000000e+00> : vector<512x32xf32>
    %6 = tpu.matmul %4, %5, %cst {dimension_numbers = #tpu.dot_dimension_numbers<[1], [0], [0], [1], [0, 0, 1, 1], [], []>} : vector<512x128xbf16>, vector<128x32xbf16>, vector<512x32xf32> -> vector<512x32xf32>
    %7 = arith.addf %3, %6 : vector<512x32xf32>
    %c0_6 = arith.constant 0 : index
    %c0_7 = arith.constant 0 : index
    %8 = vector.load %arg7[%c0_6, %c0_7] : memref<512x32xf32, #tpu.memory_space<vmem>>, vector<512x32xf32>
    tpu.vector_store %arg7[%c0_6, %c0_7], %7 {strides = array<i32>} : memref<512x32xf32, #tpu.memory_space<vmem>>, vector<512x32xf32>,
    %c0_i32_8 = arith.constant 0 : i32
    %9 = arith.cmpi eq, %arg2, %c0_i32_8 : i32
    %10 = arith.extui %9 : i1 to i32
    %c0_i32_9 = arith.constant 0 : i32
    %11 = arith.cmpi ne, %10, %c0_i32_9 : i32
    scf.if %11 {
      %c0_10 = arith.constant 0 : index
      %c0_11 = arith.constant 0 : index
      %12 = vector.load %arg7[%c0_10, %c0_11] : memref<512x32xf32, #tpu.memory_space<vmem>>, vector<512x32xf32>
      %13 = arith.truncf %12 : vector<512x32xf32> to vector<512x32xbf16>
      %c0_12 = arith.constant 0 : index
      %c0_13 = arith.constant 0 : index
      %14 = vector.load %arg5[%c0_12, %c0_13] : memref<512x32xbf16, #tpu.memory_space<vmem>>, vector<512x32xbf16>
      tpu.vector_store %arg5[%c0_12, %c0_13], %13 {strides = array<i32>} : memref<512x32xbf16, #tpu.memory_space<vmem>>, vector<512x32xbf16>,
      %cst_14 = arith.constant dense<0.000000e+00> : vector<32xf32>
      %15 = vector.multi_reduction <add>, %12, %cst_14 [0] : vector<512x32xf32> to vector<32xf32>
      %16 = vector.shape_cast %15 : vector<32xf32> to vector<1x32xf32>
      %17 = arith.mulf %12, %12 : vector<512x32xf32>
      %cst_15 = arith.constant dense<0.000000e+00> : vector<32xf32>
      %18 = vector.multi_reduction <add>, %17, %cst_15 [0] : vector<512x32xf32> to vector<32xf32>
      %19 = vector.shape_cast %18 : vector<32xf32> to vector<1x32xf32>
      %20 = tpu.concatenate %16, %19 in 0 : vector<1x32xf32>, vector<1x32xf32> -> vector<2x32xf32>
      %21 = vector.shape_cast %20 : vector<2x32xf32> to vector<1x2x32xf32>
      %c0_16 = arith.constant 0 : index
      %c0_17 = arith.constant 0 : index
      %c0_18 = arith.constant 0 : index
      %22 = vector.load %arg6[%c0_16, %c0_17, %c0_18] : memref<1x2x32xf32, #tpu.memory_space<vmem>>, vector<1x2x32xf32>
      tpu.vector_store %arg6[%c0_16, %c0_17, %c0_18], %21 {strides = array<i32>} : memref<1x2x32xf32, #tpu.memory_space<vmem>>, vector<1x2x32xf32>,
    } else {
    }
    return
  }
  func.func @transform_0(%arg0: i32, %arg1: i32, %arg2: i32) -> (i32, i32) {
    %c0_i32 = arith.constant 0 : i32
    return %arg0, %arg2 : i32, i32
  }
  func.func @transform_1(%arg0: i32, %arg1: i32, %arg2: i32) -> (i32, i32) {
    %c0_i32 = arith.constant 0 : i32
    return %arg2, %arg1 : i32, i32
  }
  func.func @transform_2(%arg0: i32, %arg1: i32, %arg2: i32) -> (i32, i32) {
    %c0_i32 = arith.constant 0 : i32
    return %arg0, %arg1 : i32, i32
  }
  func.func @transform_3(%arg0: i32, %arg1: i32, %arg2: i32) -> (i32, i32, i32) {
    %c0_i32 = arith.constant 0 : i32
    %c0_i32_0 = arith.constant 0 : i32
    return %arg0, %c0_i32, %arg1 : i32, i32, i32
  }
}

</mosaic_0001>

<llo_original>
// kernel: tpu_custom_call.1
$region0: #{tpu_custom_call.1}
  #allocation0 [shape = 'u32[]', space=smem, size = 0x4, offset = 0x4, fixed_abs, tag = 'smem constant byte address 0x4 - core index']
  #allocation1 [shape = 'u32[144,128]{1,0:T(1,128)}', space=vmem, size = 0x12000, scoped, tag = 'internal scratch']
  #allocation2 [shape = 'f32[512,32]{1,0:T(8,128)}', space=vmem, size = 0x40000, scoped, tag = 'scratch operand']
  %s0 = inlined_call_operand.hbm [shape: bf16[2048,128], index: 0, kind: input, shape index: {}]
  %s1 = inlined_call_operand.vmem [shape: bf16[128,32], index: 1, kind: input, shape index: {}]
  %s2 = inlined_call_operand.vmem [shape: bf16[2048,32], index: 2, kind: output, shape index: {0}]
  %s3 = inlined_call_operand.hbm [shape: f32[4,2,32], index: 3, kind: output, shape index: {1}]
  %4 = xla_tuple %s2, %s3
  %s5 = sld [smem:[#allocation0]]
  $region61: #{tpu_custom_call.1} parent=0
    _
  %s7 = ssub.s32 1, %s5
  %s8 = scalar_select 0, %s7, %s5
  $region1: #{tpu_custom_call.1} parent=0
    #allocation3 [shape = 'u8[262144]{0}', space=vmem, size = 0x40000, scoped, tag = 'input window, operand 0']
    #allocation4 [shape = 's32[2]{0}', space=sflag, size = 0x8, scoped, tag = 'scoped memory for tpu_custom_call.1']
    #allocation5 [shape = 's32[2]{0}', space=sflag, size = 0x8, scoped, tag = 'scoped memory for tpu_custom_call.1']
    #allocation6 [shape = 'u8[2048]{0}', space=vmem, size = 0x800, scoped, tag = 'output window, operand 1']
    %9 = vsyncpa [#allocation4], 0
    %s10 = scalar_lea.sflag [#allocation4], 1
    %11 = vsyncpa %s10, 0
    %12 = vsyncpa [#allocation5], 0
    %s13 = scalar_lea.sflag [#allocation5], 1
    %14 = vsyncpa %s13, 0
    loop: start=0, step=1, limit=6
    $region2: #{tpu_custom_call.1} parent=1 // loop_pre_header
      _
    $region3: #{tpu_custom_call.1} parent=1 // loop_header
      %s16 = sphi 0, %s20
      %p17 = scmp.ge.s32.totalorder %s16, 6
      %s23 = sphi 0, %s42
      %s24 = sphi 0, %s38
      %s25 = sphi 0, %s34
      %s26 = sphi 0, %s23
      %s27 = sphi 0, %s24
      %s28 = sphi 0, %s25
      %s29 = sphi 0, %s26
      %s30 = sphi 0, %s27
      %s31 = sphi 0, %s28
      %s47 = sphi 0, %s49
      %s50 = sphi 0, %s47
      %s51 = sphi 0, %s50
      %s67 = sphi 0, %s51
      %s75 = sphi 0, %s77
      %s78 = sphi 0, %s75
      %s79 = sphi 0, %s78
      %s95 = sphi 0, %s79
      %s103 = sphi 0, %s105
      %s106 = sphi 0, %s103
      %s107 = sphi 0, %s106
      %s123 = sphi 0, %s107
      %s131 = sphi 0, %s133
      %s134 = sphi 0, %s131
      %s135 = sphi 0, %s134
      %s151 = sphi 0, %s135
    $region4: #{tpu_custom_call.1} parent=1 // loop_header_branch
      %19 = sbr.rel (%p17) target = $region8
    $region5: #{tpu_custom_call.1} parent=1 // loop_body
      %s21 = ssub.s32 %s16, 1
      %s22 = ssub.s32 %s16, 2
      %s32 = sadd.s32 1, %s25
      %p33 = scmp.ge.s32.totalorder %s32, 1
      %s34 = scalar_select %p33, 0, %s32
      %s35 = sadd.s32 1, %s24
      %s36 = scalar_select %p33, %s35, %s24
      %p37 = scmp.ge.s32.totalorder %s36, 1
      %s38 = scalar_select %p37, 0, %s36
      %s39 = sadd.s32 1, %s23
      %s40 = scalar_select %p37, %s39, %s23
      %p41 = scmp.ge.s32.totalorder %s40, 4
      %s42 = scalar_select %p41, 0, %s40
      %s43 = ssub.s32 %s23, %s42
      %s44 = ssub.s32 %s25, %s34
      %s45 = sor.u32 %s43, %s44
      %p46 = scmp.eq.s32.totalorder %s45, 0
      %s48 = sadd.s32 %s47, 1
      %s49 = scalar_select %p46, %s47, %s48
      %p52 = pneg %p46
      %p53 = scmp.eq.s32.totalorder %s16, 3
      %p54 = por %p52, %p53
      %p55 = scmp.ne.s32.totalorder %s47, %s50
      %p56 = scmp.eq.s32.totalorder %s16, 0
      %p57 = por %p55, %p56
      %p58 = scmp.ne.s32.totalorder %s47, %s50
      %p59 = scmp.eq.s32.totalorder %s21, 3
      %p60 = por %p58, %p59
      %p61 = scmp.ne.s32.totalorder %s50, %s51
      %p62 = scmp.eq.s32.totalorder %s21, 0
      %p63 = por %p61, %p62
      %p64 = scmp.ne.s32.totalorder %s50, %s51
      %p65 = scmp.eq.s32.totalorder %s22, 3
      %p66 = por %p64, %p65
      %p68 = scmp.ne.s32.totalorder %s51, %s67
      %p69 = scmp.eq.s32.totalorder %s22, 0
      %p70 = por %p68, %p69
      %s71 = ssub.s32 %s25, %s34
      %s72 = ssub.s32 %s24, %s38
      %s73 = sor.u32 %s71, %s72
      %p74 = scmp.eq.s32.totalorder %s73, 0
      %s76 = sadd.s32 %s75, 1
      %s77 = scalar_select %p74, %s75, %s76
      %p80 = pneg %p74
      %p81 = scmp.eq.s32.totalorder %s16, 3
      %p82 = por %p80, %p81
      %p83 = scmp.ne.s32.totalorder %s75, %s78
      %p84 = scmp.eq.s32.totalorder %s16, 0
      %p85 = por %p83, %p84
      %p86 = scmp.ne.s32.totalorder %s75, %s78
      %p87 = scmp.eq.s32.totalorder %s21, 3
      %p88 = por %p86, %p87
      %p89 = scmp.ne.s32.totalorder %s78, %s79
      %p90 = scmp.eq.s32.totalorder %s21, 0
      %p91 = por %p89, %p90
      %p92 = scmp.ne.s32.totalorder %s78, %s79
      %p93 = scmp.eq.s32.totalorder %s22, 3
      %p94 = por %p92, %p93
      %p96 = scmp.ne.s32.totalorder %s79, %s95
      %p97 = scmp.eq.s32.totalorder %s22, 0
      %p98 = por %p96, %p97
      %s99 = ssub.s32 %s23, %s42
      %s100 = ssub.s32 %s24, %s38
      %s101 = sor.u32 %s99, %s100
      %p102 = scmp.eq.s32.totalorder %s101, 0
      %s104 = sadd.s32 %s103, 1
      %s105 = scalar_select %p102, %s103, %s104
      %p108 = pneg %p102
      %p109 = scmp.eq.s32.totalorder %s16, 3
      %p110 = por %p108, %p109
      %p111 = scmp.ne.s32.totalorder %s103, %s106
      %p112 = scmp.eq.s32.totalorder %s16, 0
      %p113 = por %p111, %p112
      %p114 = scmp.ne.s32.totalorder %s103, %s106
      %p115 = scmp.eq.s32.totalorder %s21, 3
      %p116 = por %p114, %p115
      %p117 = scmp.ne.s32.totalorder %s106, %s107
      %p118 = scmp.eq.s32.totalorder %s21, 0
      %p119 = por %p117, %p118
      %p120 = scmp.ne.s32.totalorder %s106, %s107
      %p121 = scmp.eq.s32.totalorder %s22, 3
      %p122 = por %p120, %p121
      %p124 = scmp.ne.s32.totalorder %s107, %s123
      %p125 = scmp.eq.s32.totalorder %s22, 0
      %p126 = por %p124, %p125
      %s127 = ssub.s32 %s23, %s42
      %s128 = ssub.s32 %s24, %s38
      %s129 = sor.u32 %s127, %s128
      %p130 = scmp.eq.s32.totalorder %s129, 0
      %s132 = sadd.s32 %s131, 1
      %s133 = scalar_select %p130, %s131, %s132
      %p136 = pneg %p130
      %p137 = scmp.eq.s32.totalorder %s16, 3
      %p138 = por %p136, %p137
      %p139 = scmp.ne.s32.totalorder %s131, %s134
      %p140 = scmp.eq.s32.totalorder %s16, 0
      %p141 = por %p139, %p140
      %p142 = scmp.ne.s32.totalorder %s131, %s134
      %p143 = scmp.eq.s32.totalorder %s21, 3
      %p144 = por %p142, %p143
      %p145 = scmp.ne.s32.totalorder %s134, %s135
      %p146 = scmp.eq.s32.totalorder %s21, 0
      %p147 = por %p145, %p146
      %p148 = scmp.ne.s32.totalorder %s134, %s135
      %p149 = scmp.eq.s32.totalorder %s22, 3
      %p150 = por %p148, %p149
      %p152 = scmp.ne.s32.totalorder %s135, %s151
      %p153 = scmp.eq.s32.totalorder %s22, 0
      %p154 = por %p152, %p153
      %p155 = scmp.le.s32.totalorder 1, %s16
      %p156 = scmp.lt.s32.totalorder %s16, 5
      %p157 = pnand %p155, %p156
      %p158 = pneg %p157
      // Predicated region
      $region9: #{tpu_custom_call.1} parent=5 // pred_check
        _
      $region10: #{tpu_custom_call.1} parent=5 // pred_check_branch
        %160 = sbr.rel (%p157) target = $region12
      $region11: #{tpu_custom_call.1} parent=5 // pred_region
        %s161 = ssub.s32 %s16, 1
        // Predicated region
        $region13: #{tpu_custom_call.1} parent=11 // pred_check
          %p162 = pneg %p91
        $region14: #{tpu_custom_call.1} parent=11 // pred_check_branch
          %164 = sbr.rel (%p162) target = $region16
        $region15: #{tpu_custom_call.1} parent=11 // pred_region
          %s165 = smul.u32 16, %s28
          %p166 = scmp.lt.s32.totalorder %s165, 15
          %s167 = scalar_select %p166, %s165, 15
          %p168 = scmp.lt.s32.totalorder %s27, 0
          %s169 = scalar_select %p168, %s27, 0
          %s170 = sadd.s32 %s169, %s167
          %s171 = smul.addr %s170, 4
          %s172 = scalar_lea.vmem %s1, %s171
          %s173 = smul.u32 16, %s28
        $region16: #{tpu_custom_call.1} parent=11 // pred_fallthru
          _
      $region12: #{tpu_custom_call.1} parent=5 // pred_fallthru
        _
      %p174 = scmp.lt.s32.totalorder %s16, 4
      // Predicated region
      $region17: #{tpu_custom_call.1} parent=5 // pred_check
        %p175 = pneg %p174
      $region18: #{tpu_custom_call.1} parent=5 // pred_check_branch
        %177 = sbr.rel (%p175) target = $region20
      $region19: #{tpu_custom_call.1} parent=5 // pred_region
        // Predicated region
        $region21: #{tpu_custom_call.1} parent=19 // pred_check
          %p178 = pneg %p57
        $region22: #{tpu_custom_call.1} parent=19 // pred_check_branch
          %180 = sbr.rel (%p178) target = $region24
        $region23: #{tpu_custom_call.1} parent=19 // pred_region
          %s181 = sand.u32 %s47, 1
          %s182 = scalar_lea.sflag [#allocation4], %s181
          %s183 = sand.u32 %s47, 1
          %s184 = smul.addr %s183, 256
          %s185 = scalar_lea.vmem [#allocation3], %s184
          %s186 = smul.u32 64, %s23
          %s188 = ssub.s32 4096, 4096
          %189 = vsyncadd %s182, %s188
          %s190 = sadd.s32 %s25, %s186
          %s191 = smul.addr %s190, 64
          %s192 = scalar_lea.hbm %s0, %s191
          %s193 = sshll.u32 %s185, 4
          %s194 = int_to_ptr.vmem [resolvable:$true] %s193
          %199 = dma.hbm_to_vmem [thread:$0]  %s192, 4096, %s194, %s182, 64, 64, 4
        $region24: #{tpu_custom_call.1} parent=19 // pred_fallthru
          _
      $region20: #{tpu_custom_call.1} parent=5 // pred_fallthru
        _
      %p200 = scmp.le.s32.totalorder 1, %s16
      %p201 = scmp.lt.s32.totalorder %s16, 5
      %p202 = pnand %p200, %p201
      %p203 = pneg %p202
      // Predicated region
      $region25: #{tpu_custom_call.1} parent=5 // pred_check
        _
      $region26: #{tpu_custom_call.1} parent=5 // pred_check_branch
        %205 = sbr.rel (%p202) target = $region28
      $region27: #{tpu_custom_call.1} parent=5 // pred_region
        %s206 = ssub.s32 %s16, 1
        %s207 = sand.u32 %s50, 1
        %s208 = scalar_lea.sflag [#allocation4], %s207
        %s209 = sand.u32 %s50, 1
        %s210 = smul.addr %s209, 256
        %s211 = scalar_lea.vmem [#allocation3], %s210
        // Predicated region
        $region29: #{tpu_custom_call.1} parent=27 // pred_check
          %p212 = pneg %p63
        $region30: #{tpu_custom_call.1} parent=27 // pred_check_branch
          %214 = sbr.rel (%p212) target = $region32
        $region31: #{tpu_custom_call.1} parent=27 // pred_region
          %215 = dma.done %s208, 4096
        $region32: #{tpu_custom_call.1} parent=27 // pred_fallthru
          _
        %s216 = sand.u32 %s50, 1
        %s217 = scalar_lea.sflag [#allocation4], %s216
        %s218 = sand.u32 %s50, 1
        %s219 = smul.addr %s218, 256
        %s220 = scalar_lea.vmem [#allocation3], %s219
        %p221 = pneg %p63
        %p222 = pneg %p60
        %s223 = smul.u32 16, %s28
        %p224 = scmp.lt.s32.totalorder %s223, 15
        %s225 = scalar_select %p224, %s223, 15
        %p226 = scmp.lt.s32.totalorder %s27, 0
        %s227 = scalar_select %p226, %s27, 0
        %s228 = sadd.s32 %s227, %s225
        %s229 = smul.addr %s228, 4
        %s230 = scalar_lea.vmem %s1, %s229
        %p231 = pneg %p91
        %p232 = pneg %p88
        %p233 = pneg %p119
        %p234 = pneg %p116
        %s235 = smul.u32 64, %s26
        %p236 = scmp.lt.s32.totalorder %s235, 255
        %s237 = scalar_select %p236, %s235, 255
        %p238 = scmp.lt.s32.totalorder %s27, 0
        %s239 = scalar_select %p238, %s27, 0
        %s240 = sadd.s32 %s239, %s237
        %s241 = smul.addr %s240, 4
        %s242 = scalar_lea.vmem %s2, %s241
        %p243 = pneg %p147
        %p244 = pneg %p144
        %s245 = sand.u32 %s134, 1
        %s246 = scalar_lea.sflag [#allocation5], %s245
        %s247 = sand.u32 %s134, 1
        %s248 = smul.addr %s247, 2
        %s249 = scalar_lea.vmem [#allocation6], %s248
        %s250 = smul.u32 64, %s26
        %s251 = smul.u32 16, %s28
        %p252 = scmp.lt.s32.totalorder %s251, 15
        %s253 = scalar_select %p252, %s251, 15
        %p254 = scmp.lt.s32.totalorder %s27, 0
        %s255 = scalar_select %p254, %s27, 0
        %s256 = sadd.s32 %s255, %s253
        %s257 = smul.addr %s256, 4
        %s258 = scalar_lea.vmem %s1, %s257
        %s259 = smul.u32 16, %s28
        %s260 = smul.u32 64, %s26
        %p261 = scmp.lt.s32.totalorder %s260, 255
        %s262 = scalar_select %p261, %s260, 255
        %p263 = scmp.lt.s32.totalorder %s27, 0
        %s264 = scalar_select %p263, %s27, 0
        %s265 = sadd.s32 %s264, %s262
        %s266 = smul.addr %s265, 4
        %s267 = scalar_lea.vmem %s2, %s266
        %s268 = smul.u32 64, %s26
        %p270 = scmp.eq.s32.totalorder %s28, 0
        // Predicated region
        $region33: #{tpu_custom_call.1} parent=27 // pred_check
          %p271 = pneg %p270
        $region34: #{tpu_custom_call.1} parent=27 // pred_check_branch
          %273 = sbr.rel (%p271) target = $region36
        $region35: #{tpu_custom_call.1} parent=27 // pred_region
          %vm274 = vcmask 261120
          %275 = vst.msk [vmem:[#allocation2] sm:$0xff] %vm274, 0.0
          %276 = vst.msk [vmem:[#allocation2 + $0x8] sm:$0xff] %vm274, 0.0
          %277 = vst.msk [vmem:[#allocation2 + $0x10] sm:$0xff] %vm274, 0.0
          %278 = vst.msk [vmem:[#allocation2 + $0x18] sm:$0xff] %vm274, 0.0
          %279 = vst.msk [vmem:[#allocation2 + $0x20] sm:$0xff] %vm274, 0.0
          %280 = vst.msk [vmem:[#allocation2 + $0x28] sm:$0xff] %vm274, 0.0
          %281 = vst.msk [vmem:[#allocation2 + $0x30] sm:$0xff] %vm274, 0.0
          %282 = vst.msk [vmem:[#allocation2 + $0x38] sm:$0xff] %vm274, 0.0
          %283 = vst.msk [vmem:[#allocation2 + $0x40] sm:$0xff] %vm274, 0.0
          %284 = vst.msk [vmem:[#allocation2 + $0x48] sm:$0xff] %vm274, 0.0
          %285 = vst.msk [vmem:[#allocation2 + $0x50] sm:$0xff] %vm274, 0.0
          %286 = vst.msk [vmem:[#allocation2 + $0x58] sm:$0xff] %vm274, 0.0
          %287 = vst.msk [vmem:[#allocation2 + $0x60] sm:$0xff] %vm274, 0.0
          %288 = vst.msk [vmem:[#allocation2 + $0x68] sm:$0xff] %vm274, 0.0
          %289 = vst.msk [vmem:[#allocation2 + $0x70] sm:$0xff] %vm274, 0.0
          %290 = vst.msk [vmem:[#allocation2 + $0x78] sm:$0xff] %vm274, 0.0
          %291 = vst.msk [vmem:[#allocation2 + $0x80] sm:$0xff] %vm274, 0.0
          %292 = vst.msk [vmem:[#allocation2 + $0x88] sm:$0xff] %vm274, 0.0
          %293 = vst.msk [vmem:[#allocation2 + $0x90] sm:$0xff] %vm274, 0.0
          %294 = vst.msk [vmem:[#allocation2 + $0x98] sm:$0xff] %vm274, 0.0
          %295 = vst.msk [vmem:[#allocation2 + $0xa0] sm:$0xff] %vm274, 0.0
          %296 = vst.msk [vmem:[#allocation2 + $0xa8] sm:$0xff] %vm274, 0.0
          %297 = vst.msk [vmem:[#allocation2 + $0xb0] sm:$0xff] %vm274, 0.0
          %298 = vst.msk [vmem:[#allocation2 + $0xb8] sm:$0xff] %vm274, 0.0
          %299 = vst.msk [vmem:[#allocation2 + $0xc0] sm:$0xff] %vm274, 0.0
          %300 = vst.msk [vmem:[#allocation2 + $0xc8] sm:$0xff] %vm274, 0.0
          %301 = vst.msk [vmem:[#allocation2 + $0xd0] sm:$0xff] %vm274, 0.0
          %302 = vst.msk [vmem:[#allocation2 + $0xd8] sm:$0xff] %vm274, 0.0
          %303 = vst.msk [vmem:[#allocation2 + $0xe0] sm:$0xff] %vm274, 0.0
          %304 = vst.msk [vmem:[#allocation2 + $0xe8] sm:$0xff] %vm274, 0.0
          %305 = vst.msk [vmem:[#allocation2 + $0xf0] sm:$0xff] %vm274, 0.0
          %306 = vst.msk [vmem:[#allocation2 + $0xf8] sm:$0xff] %vm274, 0.0
          %307 = vst.msk [vmem:[#allocation2 + $0x100] sm:$0xff] %vm274, 0.0
          %308 = vst.msk [vmem:[#allocation2 + $0x108] sm:$0xff] %vm274, 0.0
          %309 = vst.msk [vmem:[#allocation2 + $0x110] sm:$0xff] %vm274, 0.0
          %310 = vst.msk [vmem:[#allocation2 + $0x118] sm:$0xff] %vm274, 0.0
          %311 = vst.msk [vmem:[#allocation2 + $0x120] sm:$0xff] %vm274, 0.0
          %312 = vst.msk [vmem:[#allocation2 + $0x128] sm:$0xff] %vm274, 0.0
          %313 = vst.msk [vmem:[#allocation2 + $0x130] sm:$0xff] %vm274, 0.0
          %314 = vst.msk [vmem:[#allocation2 + $0x138] sm:$0xff] %vm274, 0.0
          %315 = vst.msk [vmem:[#allocation2 + $0x140] sm:$0xff] %vm274, 0.0
          %316 = vst.msk [vmem:[#allocation2 + $0x148] sm:$0xff] %vm274, 0.0
          %317 = vst.msk [vmem:[#allocation2 + $0x150] sm:$0xff] %vm274, 0.0
          %318 = vst.msk [vmem:[#allocation2 + $0x158] sm:$0xff] %vm274, 0.0
          %319 = vst.msk [vmem:[#allocation2 + $0x160] sm:$0xff] %vm274, 0.0
          %320 = vst.msk [vmem:[#allocation2 + $0x168] sm:$0xff] %vm274, 0.0
          %321 = vst.msk [vmem:[#allocation2 + $0x170] sm:$0xff] %vm274, 0.0
          %322 = vst.msk [vmem:[#allocation2 + $0x178] sm:$0xff] %vm274, 0.0
          %323 = vst.msk [vmem:[#allocation2 + $0x180] sm:$0xff] %vm274, 0.0
          %324 = vst.msk [vmem:[#allocation2 + $0x188] sm:$0xff] %vm274, 0.0
          %325 = vst.msk [vmem:[#allocation2 + $0x190] sm:$0xff] %vm274, 0.0
          %326 = vst.msk [vmem:[#allocation2 + $0x198] sm:$0xff] %vm274, 0.0
          %327 = vst.msk [vmem:[#allocation2 + $0x1a0] sm:$0xff] %vm274, 0.0
          %328 = vst.msk [vmem:[#allocation2 + $0x1a8] sm:$0xff] %vm274, 0.0
          %329 = vst.msk [vmem:[#allocation2 + $0x1b0] sm:$0xff] %vm274, 0.0
          %330 = vst.msk [vmem:[#allocation2 + $0x1b8] sm:$0xff] %vm274, 0.0
          %331 = vst.msk [vmem:[#allocation2 + $0x1c0] sm:$0xff] %vm274, 0.0
          %332 = vst.msk [vmem:[#allocation2 + $0x1c8] sm:$0xff] %vm274, 0.0
          %333 = vst.msk [vmem:[#allocation2 + $0x1d0] sm:$0xff] %vm274, 0.0
          %334 = vst.msk [vmem:[#allocation2 + $0x1d8] sm:$0xff] %vm274, 0.0
          %335 = vst.msk [vmem:[#allocation2 + $0x1e0] sm:$0xff] %vm274, 0.0
          %336 = vst.msk [vmem:[#allocation2 + $0x1e8] sm:$0xff] %vm274, 0.0
          %337 = vst.msk [vmem:[#allocation2 + $0x1f0] sm:$0xff] %vm274, 0.0
          %338 = vst.msk [vmem:[#allocation2 + $0x1f8] sm:$0xff] %vm274, 0.0
        $region36: #{tpu_custom_call.1} parent=27 // pred_fallthru
          _
        %v339 = vld [vmem:[#allocation2] sm:$0xff]
        %v340 = vld [vmem:[#allocation2 + $0x8] sm:$0xff]
        %v341 = vld [vmem:[#allocation2 + $0x10] sm:$0xff]
        %v342 = vld [vmem:[#allocation2 + $0x18] sm:$0xff]
        %v343 = vld [vmem:[#allocation2 + $0x20] sm:$0xff]
        %v344 = vld [vmem:[#allocation2 + $0x28] sm:$0xff]
        %v345 = vld [vmem:[#allocation2 + $0x30] sm:$0xff]
        %v346 = vld [vmem:[#allocation2 + $0x38] sm:$0xff]
        %v347 = vld [vmem:[#allocation2 + $0x40] sm:$0xff]
        %v348 = vld [vmem:[#allocation2 + $0x48] sm:$0xff]
        %v349 = vld [vmem:[#allocation2 + $0x50] sm:$0xff]
        %v350 = vld [vmem:[#allocation2 + $0x58] sm:$0xff]
        %v351 = vld [vmem:[#allocation2 + $0x60] sm:$0xff]
        %v352 = vld [vmem:[#allocation2 + $0x68] sm:$0xff]
        %v353 = vld [vmem:[#allocation2 + $0x70] sm:$0xff]
        %v354 = vld [vmem:[#allocation2 + $0x78] sm:$0xff]
        %v355 = vld [vmem:[#allocation2 + $0x80] sm:$0xff]
        %v356 = vld [vmem:[#allocation2 + $0x88] sm:$0xff]
        %v357 = vld [vmem:[#allocation2 + $0x90] sm:$0xff]
        %v358 = vld [vmem:[#allocation2 + $0x98] sm:$0xff]
        %v359 = vld [vmem:[#allocation2 + $0xa0] sm:$0xff]
        %v360 = vld [vmem:[#allocation2 + $0xa8] sm:$0xff]
        %v361 = vld [vmem:[#allocation2 + $0xb0] sm:$0xff]
        %v362 = vld [vmem:[#allocation2 + $0xb8] sm:$0xff]
        %v363 = vld [vmem:[#allocation2 + $0xc0] sm:$0xff]
        %v364 = vld [vmem:[#allocation2 + $0xc8] sm:$0xff]
        %v365 = vld [vmem:[#allocation2 + $0xd0] sm:$0xff]
        %v366 = vld [vmem:[#allocation2 + $0xd8] sm:$0xff]
        %v367 = vld [vmem:[#allocation2 + $0xe0] sm:$0xff]
        %v368 = vld [vmem:[#allocation2 + $0xe8] sm:$0xff]
        %v369 = vld [vmem:[#allocation2 + $0xf0] sm:$0xff]
        %v370 = vld [vmem:[#allocation2 + $0xf8] sm:$0xff]
        %v371 = vld [vmem:[#allocation2 + $0x100] sm:$0xff]
        %v372 = vld [vmem:[#allocation2 + $0x108] sm:$0xff]
        %v373 = vld [vmem:[#allocation2 + $0x110] sm:$0xff]
        %v374 = vld [vmem:[#allocation2 + $0x118] sm:$0xff]
        %v375 = vld [vmem:[#allocation2 + $0x120] sm:$0xff]
        %v376 = vld [vmem:[#allocation2 + $0x128] sm:$0xff]
        %v377 = vld [vmem:[#allocation2 + $0x130] sm:$0xff]
        %v378 = vld [vmem:[#allocation2 + $0x138] sm:$0xff]
        %v379 = vld [vmem:[#allocation2 + $0x140] sm:$0xff]
        %v380 = vld [vmem:[#allocation2 + $0x148] sm:$0xff]
        %v381 = vld [vmem:[#allocation2 + $0x150] sm:$0xff]
        %v382 = vld [vmem:[#allocation2 + $0x158] sm:$0xff]
        %v383 = vld [vmem:[#allocation2 + $0x160] sm:$0xff]
        %v384 = vld [vmem:[#allocation2 + $0x168] sm:$0xff]
        %v385 = vld [vmem:[#allocation2 + $0x170] sm:$0xff]
        %v386 = vld [vmem:[#allocation2 + $0x178] sm:$0xff]
        %v387 = vld [vmem:[#allocation2 + $0x180] sm:$0xff]
        %v388 = vld [vmem:[#allocation2 + $0x188] sm:$0xff]
        %v389 = vld [vmem:[#allocation2 + $0x190] sm:$0xff]
        %v390 = vld [vmem:[#allocation2 + $0x198] sm:$0xff]
        %v391 = vld [vmem:[#allocation2 + $0x1a0] sm:$0xff]
        %v392 = vld [vmem:[#allocation2 + $0x1a8] sm:$0xff]
        %v393 = vld [vmem:[#allocation2 + $0x1b0] sm:$0xff]
        %v394 = vld [vmem:[#allocation2 + $0x1b8] sm:$0xff]
        %v395 = vld [vmem:[#allocation2 + $0x1c0] sm:$0xff]
        %v396 = vld [vmem:[#allocation2 + $0x1c8] sm:$0xff]
        %v397 = vld [vmem:[#allocation2 + $0x1d0] sm:$0xff]
        %v398 = vld [vmem:[#allocation2 + $0x1d8] sm:$0xff]
        %v399 = vld [vmem:[#allocation2 + $0x1e0] sm:$0xff]
        %v400 = vld [vmem:[#allocation2 + $0x1e8] sm:$0xff]
        %v401 = vld [vmem:[#allocation2 + $0x1f0] sm:$0xff]
        %v402 = vld [vmem:[#allocation2 + $0x1f8] sm:$0xff]
        %v403 = vld [vmem:[%s211] sm:$0xf]
        %v404 = vld [vmem:[%s211 + $0x4] sm:$0xf]
        %v405 = vld [vmem:[%s211 + $0x8] sm:$0xf]
        %v406 = vld [vmem:[%s211 + $0xc] sm:$0xf]
        %v407 = vld [vmem:[%s211 + $0x10] sm:$0xf]
        %v408 = vld [vmem:[%s211 + $0x14] sm:$0xf]
        %v409 = vld [vmem:[%s211 + $0x18] sm:$0xf]
        %v410 = vld [vmem:[%s211 + $0x1c] sm:$0xf]
        %v411 = vld [vmem:[%s211 + $0x20] sm:$0xf]
        %v412 = vld [vmem:[%s211 + $0x24] sm:$0xf]
        %v413 = vld [vmem:[%s211 + $0x28] sm:$0xf]
        %v414 = vld [vmem:[%s211 + $0x2c] sm:$0xf]
        %v415 = vld [vmem:[%s211 + $0x30] sm:$0xf]
        %v416 = vld [vmem:[%s211 + $0x34] sm:$0xf]
        %v417 = vld [vmem:[%s211 + $0x38] sm:$0xf]
        %v418 = vld [vmem:[%s211 + $0x3c] sm:$0xf]
        %v419 = vld [vmem:[%s211 + $0x40] sm:$0xf]
        %v420 = vld [vmem:[%s211 + $0x44] sm:$0xf]
        %v421 = vld [vmem:[%s211 + $0x48] sm:$0xf]
        %v422 = vld [vmem:[%s211 + $0x4c] sm:$0xf]
        %v423 = vld [vmem:[%s211 + $0x50] sm:$0xf]
        %v424 = vld [vmem:[%s211 + $0x54] sm:$0xf]
        %v425 = vld [vmem:[%s211 + $0x58] sm:$0xf]
        %v426 = vld [vmem:[%s211 + $0x5c] sm:$0xf]
        %v427 = vld [vmem:[%s211 + $0x60] sm:$0xf]
        %v428 = vld [vmem:[%s211 + $0x64] sm:$0xf]
        %v429 = vld [vmem:[%s211 + $0x68] sm:$0xf]
        %v430 = vld [vmem:[%s211 + $0x6c] sm:$0xf]
        %v431 = vld [vmem:[%s211 + $0x70] sm:$0xf]
        %v432 = vld [vmem:[%s211 + $0x74] sm:$0xf]
        %v433 = vld [vmem:[%s211 + $0x78] sm:$0xf]
        %v434 = vld [vmem:[%s211 + $0x7c] sm:$0xf]
        %v435 = vld [vmem:[%s211 + $0x80] sm:$0xf]
        %v436 = vld [vmem:[%s211 + $0x84] sm:$0xf]
        %v437 = vld [vmem:[%s211 + $0x88] sm:$0xf]
        %v438 = vld [vmem:[%s211 + $0x8c] sm:$0xf]
        %v439 = vld [vmem:[%s211 + $0x90] sm:$0xf]
        %v440 = vld [vmem:[%s211 + $0x94] sm:$0xf]
        %v441 = vld [vmem:[%s211 + $0x98] sm:$0xf]
        %v442 = vld [vmem:[%s211 + $0x9c] sm:$0xf]
        %v443 = vld [vmem:[%s211 + $0xa0] sm:$0xf]
        %v444 = vld [vmem:[%s211 + $0xa4] sm:$0xf]
        %v445 = vld [vmem:[%s211 + $0xa8] sm:$0xf]
        %v446 = vld [vmem:[%s211 + $0xac] sm:$0xf]
        %v447 = vld [vmem:[%s211 + $0xb0] sm:$0xf]
        %v448 = vld [vmem:[%s211 + $0xb4] sm:$0xf]
        %v449 = vld [vmem:[%s211 + $0xb8] sm:$0xf]
        %v450 = vld [vmem:[%s211 + $0xbc] sm:$0xf]
        %v451 = vld [vmem:[%s211 + $0xc0] sm:$0xf]
        %v452 = vld [vmem:[%s211 + $0xc4] sm:$0xf]
        %v453 = vld [vmem:[%s211 + $0xc8] sm:$0xf]
        %v454 = vld [vmem:[%s211 + $0xcc] sm:$0xf]
        %v455 = vld [vmem:[%s211 + $0xd0] sm:$0xf]
        %v456 = vld [vmem:[%s211 + $0xd4] sm:$0xf]
        %v457 = vld [vmem:[%s211 + $0xd8] sm:$0xf]
        %v458 = vld [vmem:[%s211 + $0xdc] sm:$0xf]
        %v459 = vld [vmem:[%s211 + $0xe0] sm:$0xf]
        %v460 = vld [vmem:[%s211 + $0xe4] sm:$0xf]
        %v461 = vld [vmem:[%s211 + $0xe8] sm:$0xf]
        %v462 = vld [vmem:[%s211 + $0xec] sm:$0xf]
        %v463 = vld [vmem:[%s211 + $0xf0] sm:$0xf]
        %v464 = vld [vmem:[%s211 + $0xf4] sm:$0xf]
        %v465 = vld [vmem:[%s211 + $0xf8] sm:$0xf]
        %v466 = vld [vmem:[%s211 + $0xfc] sm:$0xf]
        %v467 = vld [vmem:[%s258] sm:$0xf]
        %v468 = vld [vmem:[%s258 + $0x4] sm:$0xf]
        %v469 = vld [vmem:[%s258 + $0x8] sm:$0xf]
        %v470 = vld [vmem:[%s258 + $0xc] sm:$0xf]
        %v471 = vld [vmem:[%s258 + $0x10] sm:$0xf]
        %v472 = vld [vmem:[%s258 + $0x14] sm:$0xf]
        %v473 = vld [vmem:[%s258 + $0x18] sm:$0xf]
        %v474 = vld [vmem:[%s258 + $0x1c] sm:$0xf]
        %v475 = vld [vmem:[%s258 + $0x20] sm:$0xf]
        %v476 = vld [vmem:[%s258 + $0x24] sm:$0xf]
        %v477 = vld [vmem:[%s258 + $0x28] sm:$0xf]
        %v478 = vld [vmem:[%s258 + $0x2c] sm:$0xf]
        %v479 = vld [vmem:[%s258 + $0x30] sm:$0xf]
        %v480 = vld [vmem:[%s258 + $0x34] sm:$0xf]
        %v481 = vld [vmem:[%s258 + $0x38] sm:$0xf]
        %v482 = vld [vmem:[%s258 + $0x3c] sm:$0xf]
        %v547 = vunpack.c.l.b16 %v403
        %v548 = vunpack.c.l.b16 %v404
        %v549 = vunpack.c.l.b16 %v405
        %v550 = vunpack.c.l.b16 %v406
        %v551 = vunpack.c.l.b16 %v407
        %v552 = vunpack.c.l.b16 %v408
        %v553 = vunpack.c.l.b16 %v409
        %v554 = vunpack.c.l.b16 %v410
        %v555 = vunpack.c.l.b16 %v411
        %v556 = vunpack.c.l.b16 %v412
        %v557 = vunpack.c.l.b16 %v413
        %v558 = vunpack.c.l.b16 %v414
        %v559 = vunpack.c.l.b16 %v415
        %v560 = vunpack.c.l.b16 %v416
        %v561 = vunpack.c.l.b16 %v417
        %v562 = vunpack.c.l.b16 %v418
        %v563 = vunpack.c.l.b16 %v419
        %v564 = vunpack.c.l.b16 %v420
        %v565 = vunpack.c.l.b16 %v421
        %v566 = vunpack.c.l.b16 %v422
        %v567 = vunpack.c.l.b16 %v423
        %v568 = vunpack.c.l.b16 %v424
        %v569 = vunpack.c.l.b16 %v425
        %v570 = vunpack.c.l.b16 %v426
        %v571 = vunpack.c.l.b16 %v427
        %v572 = vunpack.c.l.b16 %v428
        %v573 = vunpack.c.l.b16 %v429
        %v574 = vunpack.c.l.b16 %v430
        %v575 = vunpack.c.l.b16 %v431
        %v576 = vunpack.c.l.b16 %v432
        %v577 = vunpack.c.l.b16 %v433
        %v578 = vunpack.c.l.b16 %v434
        %v579 = vunpack.c.l.b16 %v435
        %v580 = vunpack.c.l.b16 %v436
        %v581 = vunpack.c.l.b16 %v437
        %v582 = vunpack.c.l.b16 %v438
        %v583 = vunpack.c.l.b16 %v439
        %v584 = vunpack.c.l.b16 %v440
        %v585 = vunpack.c.l.b16 %v441
        %v586 = vunpack.c.l.b16 %v442
        %v587 = vunpack.c.l.b16 %v443
        %v588 = vunpack.c.l.b16 %v444
        %v589 = vunpack.c.l.b16 %v445
        %v590 = vunpack.c.l.b16 %v446
        %v591 = vunpack.c.l.b16 %v447
        %v592 = vunpack.c.l.b16 %v448
        %v593 = vunpack.c.l.b16 %v449
        %v594 = vunpack.c.l.b16 %v450
        %v595 = vunpack.c.l.b16 %v451
        %v596 = vunpack.c.l.b16 %v452
        %v597 = vunpack.c.l.b16 %v453
        %v598 = vunpack.c.l.b16 %v454
        %v599 = vunpack.c.l.b16 %v455
        %v600 = vunpack.c.l.b16 %v456
        %v601 = vunpack.c.l.b16 %v457
        %v602 = vunpack.c.l.b16 %v458
        %v603 = vunpack.c.l.b16 %v459
        %v604 = vunpack.c.l.b16 %v460
        %v605 = vunpack.c.l.b16 %v461
        %v606 = vunpack.c.l.b16 %v462
        %v607 = vunpack.c.l.b16 %v463
        %v608 = vunpack.c.l.b16 %v464
        %v609 = vunpack.c.l.b16 %v465
        %v610 = vunpack.c.l.b16 %v466
        %v611 = vpack.c.b16 %v548, %v547
        %v612 = vpack.c.b16 %v550, %v549
        %v613 = vpack.c.b16 %v552, %v551
        %v614 = vpack.c.b16 %v554, %v553
        %v615 = vpack.c.b16 %v556, %v555
        %v616 = vpack.c.b16 %v558, %v557
        %v617 = vpack.c.b16 %v560, %v559
        %v618 = vpack.c.b16 %v562, %v561
        %v619 = vpack.c.b16 %v564, %v563
        %v620 = vpack.c.b16 %v566, %v565
        %v621 = vpack.c.b16 %v568, %v567
        %v622 = vpack.c.b16 %v570, %v569
        %v623 = vpack.c.b16 %v572, %v571
        %v624 = vpack.c.b16 %v574, %v573
        %v625 = vpack.c.b16 %v576, %v575
        %v626 = vpack.c.b16 %v578, %v577
        %v627 = vpack.c.b16 %v580, %v579
        %v628 = vpack.c.b16 %v582, %v581
        %v629 = vpack.c.b16 %v584, %v583
        %v630 = vpack.c.b16 %v586, %v585
        %v631 = vpack.c.b16 %v588, %v587
        %v632 = vpack.c.b16 %v590, %v589
        %v633 = vpack.c.b16 %v592, %v591
        %v634 = vpack.c.b16 %v594, %v593
        %v635 = vpack.c.b16 %v596, %v595
        %v636 = vpack.c.b16 %v598, %v597
        %v637 = vpack.c.b16 %v600, %v599
        %v638 = vpack.c.b16 %v602, %v601
        %v639 = vpack.c.b16 %v604, %v603
        %v640 = vpack.c.b16 %v606, %v605
        %v641 = vpack.c.b16 %v608, %v607
        %v642 = vpack.c.b16 %v610, %v609
        %v691 = vunpack.c.l.b16 %v467
        %v692 = vunpack.c.l.b16 %v468
        %v693 = vunpack.c.l.b16 %v469
        %v694 = vunpack.c.l.b16 %v470
        %v695 = vunpack.c.l.b16 %v471
        %v696 = vunpack.c.l.b16 %v472
        %v697 = vunpack.c.l.b16 %v473
        %v698 = vunpack.c.l.b16 %v474
        %v699 = vunpack.c.l.b16 %v475
        %v700 = vunpack.c.l.b16 %v476
        %v701 = vunpack.c.l.b16 %v477
        %v702 = vunpack.c.l.b16 %v478
        %v703 = vunpack.c.l.b16 %v479
        %v704 = vunpack.c.l.b16 %v480
        %v705 = vunpack.c.l.b16 %v481
        %v706 = vunpack.c.l.b16 %v482
        %v707 = vpack.c.b16 %v692, %v691
        %v708 = vpack.c.b16 %v694, %v693
        %v709 = vpack.c.b16 %v696, %v695
        %v710 = vpack.c.b16 %v698, %v697
        %v711 = vpack.c.b16 %v700, %v699
        %v712 = vpack.c.b16 %v702, %v701
        %v713 = vpack.c.b16 %v704, %v703
        %v714 = vpack.c.b16 %v706, %v705
        %723 = vmatprep.subr.bf16.mxu0 0
        %724 = vmatpush1.bf16.msra.mxu0 %v707
        %725 = vmatprep.subr.bf16.mxu0 0
        %726 = vmatpush1.bf16.msra.mxu0 %v708
        %727 = vmatprep.subr.bf16.mxu0 0
        %728 = vmatpush1.bf16.msra.mxu0 %v709
        %729 = vmatprep.subr.bf16.mxu0 0
        %730 = vmatpush1.bf16.msra.mxu0 %v710
        %731 = vmatprep.subr.bf16.mxu0 0
        %732 = vmatpush1.bf16.msra.mxu0 %v711
        %733 = vmatprep.subr.bf16.mxu0 0
        %734 = vmatpush1.bf16.msra.mxu0 %v712
        %735 = vmatprep.subr.bf16.mxu0 0
        %736 = vmatpush1.bf16.msra.mxu0 %v713
        %737 = vmatprep.subr.bf16.mxu0 0
        %738 = vmatpush1.bf16.msra.mxu0 %v714
        %739 = vmatprep.subr.bf16.mxu0 0
        %740 = vmatpush1.bf16.msra.mxu0 0
        %741 = vmatprep.subr.bf16.mxu0 0
        %742 = vmatpush1.bf16.msra.mxu0 0
        %743 = vmatprep.subr.bf16.mxu0 0
        %744 = vmatpush1.bf16.msra.mxu0 0
        %745 = vmatprep.subr.bf16.mxu0 0
        %746 = vmatpush1.bf16.msra.mxu0 0
        %747 = vmatprep.subr.bf16.mxu0 0
        %748 = vmatpush1.bf16.msra.mxu0 0
        %749 = vmatprep.subr.bf16.mxu0 0
        %750 = vmatpush1.bf16.msra.mxu0 0
        %751 = vmatprep.subr.bf16.mxu0 0
        %752 = vmatpush1.bf16.msra.mxu0 0
        %753 = vmatprep.subr.bf16.mxu0 0
        %754 = vmatpush1.bf16.msra.mxu0 0
        %755 = vmatprep.mubr.bf16.mxu0 0
        %756 = vmatmul.mubr.bf16.gmra.mrb[0].mxu0 %v611
        %v757 = vpop.f32.mrb[0].mxu0
        %v758 = vadd.f32 0.0, %v757
        %v759 = vpop.f32.mrb[0].mxu0
        %v760 = vpop.f32.mrb[0].mxu0
        %v761 = vadd.f32 0.0, %v760
        %v762 = vpop.f32.mrb[0].mxu0
        %763 = vmatprep.mubr.bf16.mxu0 0
        %764 = vmatmul.mubr.bf16.gmra.mrb[0].mxu0 %v612
        %v765 = vpop.f32.mrb[0].mxu0
        %v766 = vadd.f32 0.0, %v765
        %v767 = vpop.f32.mrb[0].mxu0
        %v768 = vpop.f32.mrb[0].mxu0
        %v769 = vadd.f32 0.0, %v768
        %v770 = vpop.f32.mrb[0].mxu0
        %771 = vmatprep.mubr.bf16.mxu0 0
        %772 = vmatmul.mubr.bf16.gmra.mrb[0].mxu0 %v613
        %v773 = vpop.f32.mrb[0].mxu0
        %v774 = vadd.f32 0.0, %v773
        %v775 = vpop.f32.mrb[0].mxu0
        %v776 = vpop.f32.mrb[0].mxu0
        %v777 = vadd.f32 0.0, %v776
        %v778 = vpop.f32.mrb[0].mxu0
        %779 = vmatprep.mubr.bf16.mxu0 0
        %780 = vmatmul.mubr.bf16.gmra.mrb[0].mxu0 %v614
        %v781 = vpop.f32.mrb[0].mxu0
        %v782 = vadd.f32 0.0, %v781
        %v783 = vpop.f32.mrb[0].mxu0
        %v784 = vpop.f32.mrb[0].mxu0
        %v785 = vadd.f32 0.0, %v784
        %v786 = vpop.f32.mrb[0].mxu0
        %787 = vmatprep.mubr.bf16.mxu0 0
        %788 = vmatmul.mubr.bf16.gmra.mrb[0].mxu0 %v615
        %v789 = vpop.f32.mrb[0].mxu0
        %v790 = vadd.f32 0.0, %v789
        %v791 = vpop.f32.mrb[0].mxu0
        %v792 = vpop.f32.mrb[0].mxu0
        %v793 = vadd.f32 0.0, %v792
        %v794 = vpop.f32.mrb[0].mxu0
        %795 = vmatprep.mubr.bf16.mxu0 0
        %796 = vmatmul.mubr.bf16.gmra.mrb[0].mxu0 %v616
        %v797 = vpop.f32.mrb[0].mxu0
        %v798 = vadd.f32 0.0, %v797
        %v799 = vpop.f32.mrb[0].mxu0
        %v800 = vpop.f32.mrb[0].mxu0
        %v801 = vadd.f32 0.0, %v800
        %v802 = vpop.f32.mrb[0].mxu0
        %803 = vmatprep.mubr.bf16.mxu0 0
        %804 = vmatmul.mubr.bf16.gmra.mrb[0].mxu0 %v617
        %v805 = vpop.f32.mrb[0].mxu0
        %v806 = vadd.f32 0.0, %v805
        %v807 = vpop.f32.mrb[0].mxu0
        %v808 = vpop.f32.mrb[0].mxu0
        %v809 = vadd.f32 0.0, %v808
        %v810 = vpop.f32.mrb[0].mxu0
        %811 = vmatprep.mubr.bf16.mxu0 0
        %812 = vmatmul.mubr.bf16.gmra.mrb[0].mxu0 %v618
        %v813 = vpop.f32.mrb[0].mxu0
        %v814 = vadd.f32 0.0, %v813
        %v815 = vpop.f32.mrb[0].mxu0
        %v816 = vpop.f32.mrb[0].mxu0
        %v817 = vadd.f32 0.0, %v816
        %v818 = vpop.f32.mrb[0].mxu0
        %819 = vmatprep.mubr.bf16.mxu0 0
        %820 = vmatmul.mubr.bf16.gmra.mrb[0].mxu0 %v619
        %v821 = vpop.f32.mrb[0].mxu0
        %v822 = vadd.f32 0.0, %v821
        %v823 = vpop.f32.mrb[0].mxu0
        %v824 = vpop.f32.mrb[0].mxu0
        %v825 = vadd.f32 0.0, %v824
        %v826 = vpop.f32.mrb[0].mxu0
        %827 = vmatprep.mubr.bf16.mxu0 0
        %828 = vmatmul.mubr.bf16.gmra.mrb[0].mxu0 %v620
        %v829 = vpop.f32.mrb[0].mxu0
        %v830 = vadd.f32 0.0, %v829
        %v831 = vpop.f32.mrb[0].mxu0
        %v832 = vpop.f32.mrb[0].mxu0
        %v833 = vadd.f32 0.0, %v832
        %v834 = vpop.f32.mrb[0].mxu0
        %835 = vmatprep.mubr.bf16.mxu0 0
        %836 = vmatmul.mubr.bf16.gmra.mrb[0].mxu0 %v621
        %v837 = vpop.f32.mrb[0].mxu0
        %v838 = vadd.f32 0.0, %v837
        %v839 = vpop.f32.mrb[0].mxu0
        %v840 = vpop.f32.mrb[0].mxu0
        %v841 = vadd.f32 0.0, %v840
        %v842 = vpop.f32.mrb[0].mxu0
        %843 = vmatprep.mubr.bf16.mxu0 0
        %844 = vmatmul.mubr.bf16.gmra.mrb[0].mxu0 %v622
        %v845 = vpop.f32.mrb[0].mxu0
        %v846 = vadd.f32 0.0, %v845
        %v847 = vpop.f32.mrb[0].mxu0
        %v848 = vpop.f32.mrb[0].mxu0
        %v849 = vadd.f32 0.0, %v848
        %v850 = vpop.f32.mrb[0].mxu0
        %851 = vmatprep.mubr.bf16.mxu0 0
        %852 = vmatmul.mubr.bf16.gmra.mrb[0].mxu0 %v623
        %v853 = vpop.f32.mrb[0].mxu0
        %v854 = vadd.f32 0.0, %v853
        %v855 = vpop.f32.mrb[0].mxu0
        %v856 = vpop.f32.mrb[0].mxu0
        %v857 = vadd.f32 0.0, %v856
        %v858 = vpop.f32.mrb[0].mxu0
        %859 = vmatprep.mubr.bf16.mxu0 0
        %860 = vmatmul.mubr.bf16.gmra.mrb[0].mxu0 %v624
        %v861 = vpop.f32.mrb[0].mxu0
        %v862 = vadd.f32 0.0, %v861
        %v863 = vpop.f32.mrb[0].mxu0
        %v864 = vpop.f32.mrb[0].mxu0
        %v865 = vadd.f32 0.0, %v864
        %v866 = vpop.f32.mrb[0].mxu0
        %867 = vmatprep.mubr.bf16.mxu0 0
        %868 = vmatmul.mubr.bf16.gmra.mrb[0].mxu0 %v625
        %v869 = vpop.f32.mrb[0].mxu0
        %v870 = vadd.f32 0.0, %v869
        %v871 = vpop.f32.mrb[0].mxu0
        %v872 = vpop.f32.mrb[0].mxu0
        %v873 = vadd.f32 0.0, %v872
        %v874 = vpop.f32.mrb[0].mxu0
        %875 = vmatprep.mubr.bf16.mxu0 0
        %876 = vmatmul.mubr.bf16.gmra.mrb[0].mxu0 %v626
        %v877 = vpop.f32.mrb[0].mxu0
        %v878 = vadd.f32 0.0, %v877
        %v879 = vpop.f32.mrb[0].mxu0
        %v880 = vpop.f32.mrb[0].mxu0
        %v881 = vadd.f32 0.0, %v880
        %v882 = vpop.f32.mrb[0].mxu0
        %883 = vmatprep.mubr.bf16.mxu0 0
        %884 = vmatmul.mubr.bf16.gmra.mrb[0].mxu0 %v627
        %v885 = vpop.f32.mrb[0].mxu0
        %v886 = vadd.f32 0.0, %v885
        %v887 = vpop.f32.mrb[0].mxu0
        %v888 = vpop.f32.mrb[0].mxu0
        %v889 = vadd.f32 0.0, %v888
        %v890 = vpop.f32.mrb[0].mxu0
        %891 = vmatprep.mubr.bf16.mxu0 0
        %892 = vmatmul.mubr.bf16.gmra.mrb[0].mxu0 %v628
        %v893 = vpop.f32.mrb[0].mxu0
        %v894 = vadd.f32 0.0, %v893
        %v895 = vpop.f32.mrb[0].mxu0
        %v896 = vpop.f32.mrb[0].mxu0
        %v897 = vadd.f32 0.0, %v896
        %v898 = vpop.f32.mrb[0].mxu0
        %899 = vmatprep.mubr.bf16.mxu0 0
        %900 = vmatmul.mubr.bf16.gmra.mrb[0].mxu0 %v629
        %v901 = vpop.f32.mrb[0].mxu0
        %v902 = vadd.f32 0.0, %v901
        %v903 = vpop.f32.mrb[0].mxu0
        %v904 = vpop.f32.mrb[0].mxu0
        %v905 = vadd.f32 0.0, %v904
        %v906 = vpop.f32.mrb[0].mxu0
        %907 = vmatprep.mubr.bf16.mxu0 0
        %908 = vmatmul.mubr.bf16.gmra.mrb[0].mxu0 %v630
        %v909 = vpop.f32.mrb[0].mxu0
        %v910 = vadd.f32 0.0, %v909
        %v911 = vpop.f32.mrb[0].mxu0
        %v912 = vpop.f32.mrb[0].mxu0
        %v913 = vadd.f32 0.0, %v912
        %v914 = vpop.f32.mrb[0].mxu0
        %915 = vmatprep.mubr.bf16.mxu0 0
        %916 = vmatmul.mubr.bf16.gmra.mrb[0].mxu0 %v631
        %v917 = vpop.f32.mrb[0].mxu0
        %v918 = vadd.f32 0.0, %v917
        %v919 = vpop.f32.mrb[0].mxu0
        %v920 = vpop.f32.mrb[0].mxu0
        %v921 = vadd.f32 0.0, %v920
        %v922 = vpop.f32.mrb[0].mxu0
        %923 = vmatprep.mubr.bf16.mxu0 0
        %924 = vmatmul.mubr.bf16.gmra.mrb[0].mxu0 %v632
        %v925 = vpop.f32.mrb[0].mxu0
        %v926 = vadd.f32 0.0, %v925
        %v927 = vpop.f32.mrb[0].mxu0
        %v928 = vpop.f32.mrb[0].mxu0
        %v929 = vadd.f32 0.0, %v928
        %v930 = vpop.f32.mrb[0].mxu0
        %931 = vmatprep.mubr.bf16.mxu0 0
        %932 = vmatmul.mubr.bf16.gmra.mrb[0].mxu0 %v633
        %v933 = vpop.f32.mrb[0].mxu0
        %v934 = vadd.f32 0.0, %v933
        %v935 = vpop.f32.mrb[0].mxu0
        %v936 = vpop.f32.mrb[0].mxu0
        %v937 = vadd.f32 0.0, %v936
        %v938 = vpop.f32.mrb[0].mxu0
        %939 = vmatprep.mubr.bf16.mxu0 0
        %940 = vmatmul.mubr.bf16.gmra.mrb[0].mxu0 %v634
        %v941 = vpop.f32.mrb[0].mxu0
        %v942 = vadd.f32 0.0, %v941
        %v943 = vpop.f32.mrb[0].mxu0
        %v944 = vpop.f32.mrb[0].mxu0
        %v945 = vadd.f32 0.0, %v944
        %v946 = vpop.f32.mrb[0].mxu0
        %947 = vmatprep.mubr.bf16.mxu0 0
        %948 = vmatmul.mubr.bf16.gmra.mrb[0].mxu0 %v635
        %v949 = vpop.f32.mrb[0].mxu0
        %v950 = vadd.f32 0.0, %v949
        %v951 = vpop.f32.mrb[0].mxu0
        %v952 = vpop.f32.mrb[0].mxu0
        %v953 = vadd.f32 0.0, %v952
        %v954 = vpop.f32.mrb[0].mxu0
        %955 = vmatprep.mubr.bf16.mxu0 0
        %956 = vmatmul.mubr.bf16.gmra.mrb[0].mxu0 %v636
        %v957 = vpop.f32.mrb[0].mxu0
        %v958 = vadd.f32 0.0, %v957
        %v959 = vpop.f32.mrb[0].mxu0
        %v960 = vpop.f32.mrb[0].mxu0
        %v961 = vadd.f32 0.0, %v960
        %v962 = vpop.f32.mrb[0].mxu0
        %963 = vmatprep.mubr.bf16.mxu0 0
        %964 = vmatmul.mubr.bf16.gmra.mrb[0].mxu0 %v637
        %v965 = vpop.f32.mrb[0].mxu0
        %v966 = vadd.f32 0.0, %v965
        %v967 = vpop.f32.mrb[0].mxu0
        %v968 = vpop.f32.mrb[0].mxu0
        %v969 = vadd.f32 0.0, %v968
        %v970 = vpop.f32.mrb[0].mxu0
        %971 = vmatprep.mubr.bf16.mxu0 0
        %972 = vmatmul.mubr.bf16.gmra.mrb[0].mxu0 %v638
        %v973 = vpop.f32.mrb[0].mxu0
        %v974 = vadd.f32 0.0, %v973
        %v975 = vpop.f32.mrb[0].mxu0
        %v976 = vpop.f32.mrb[0].mxu0
        %v977 = vadd.f32 0.0, %v976
        %v978 = vpop.f32.mrb[0].mxu0
        %979 = vmatprep.mubr.bf16.mxu0 0
        %980 = vmatmul.mubr.bf16.gmra.mrb[0].mxu0 %v639
        %v981 = vpop.f32.mrb[0].mxu0
        %v982 = vadd.f32 0.0, %v981
        %v983 = vpop.f32.mrb[0].mxu0
        %v984 = vpop.f32.mrb[0].mxu0
        %v985 = vadd.f32 0.0, %v984
        %v986 = vpop.f32.mrb[0].mxu0
        %987 = vmatprep.mubr.bf16.mxu0 0
        %988 = vmatmul.mubr.bf16.gmra.mrb[0].mxu0 %v640
        %v989 = vpop.f32.mrb[0].mxu0
        %v990 = vadd.f32 0.0, %v989
        %v991 = vpop.f32.mrb[0].mxu0
        %v992 = vpop.f32.mrb[0].mxu0
        %v993 = vadd.f32 0.0, %v992
        %v994 = vpop.f32.mrb[0].mxu0
        %995 = vmatprep.mubr.bf16.mxu0 0
        %996 = vmatmul.mubr.bf16.gmra.mrb[0].mxu0 %v641
        %v997 = vpop.f32.mrb[0].mxu0
        %v998 = vadd.f32 0.0, %v997
        %v999 = vpop.f32.mrb[0].mxu0
        %v1000 = vpop.f32.mrb[0].mxu0
        %v1001 = vadd.f32 0.0, %v1000
        %v1002 = vpop.f32.mrb[0].mxu0
        %1003 = vmatprep.mubr.bf16.mxu0 0
        %1004 = vmatmul.mubr.bf16.gmra.mrb[0].mxu0 %v642
        %v1005 = vpop.f32.mrb[0].mxu0
        %v1006 = vadd.f32 0.0, %v1005
        %v1007 = vpop.f32.mrb[0].mxu0
        %v1008 = vpop.f32.mrb[0].mxu0
        %v1009 = vadd.f32 0.0, %v1008
        %v1010 = vpop.f32.mrb[0].mxu0
        %1011 = vdwg.mxu0
        %v1012 = vadd.f32 %v339, %v758
        %v1013 = vadd.f32 %v340, %v761
        %v1014 = vadd.f32 %v341, %v766
        %v1015 = vadd.f32 %v342, %v769
        %v1016 = vadd.f32 %v343, %v774
        %v1017 = vadd.f32 %v344, %v777
        %v1018 = vadd.f32 %v345, %v782
        %v1019 = vadd.f32 %v346, %v785
        %v1020 = vadd.f32 %v347, %v790
        %v1021 = vadd.f32 %v348, %v793
        %v1022 = vadd.f32 %v349, %v798
        %v1023 = vadd.f32 %v350, %v801
        %v1024 = vadd.f32 %v351, %v806
        %v1025 = vadd.f32 %v352, %v809
        %v1026 = vadd.f32 %v353, %v814
        %v1027 = vadd.f32 %v354, %v817
        %v1028 = vadd.f32 %v355, %v822
        %v1029 = vadd.f32 %v356, %v825
        %v1030 = vadd.f32 %v357, %v830
        %v1031 = vadd.f32 %v358, %v833
        %v1032 = vadd.f32 %v359, %v838
        %v1033 = vadd.f32 %v360, %v841
        %v1034 = vadd.f32 %v361, %v846
        %v1035 = vadd.f32 %v362, %v849
        %v1036 = vadd.f32 %v363, %v854
        %v1037 = vadd.f32 %v364, %v857
        %v1038 = vadd.f32 %v365, %v862
        %v1039 = vadd.f32 %v366, %v865
        %v1040 = vadd.f32 %v367, %v870
        %v1041 = vadd.f32 %v368, %v873
        %v1042 = vadd.f32 %v369, %v878
        %v1043 = vadd.f32 %v370, %v881
        %v1044 = vadd.f32 %v371, %v886
        %v1045 = vadd.f32 %v372, %v889
        %v1046 = vadd.f32 %v373, %v894
        %v1047 = vadd.f32 %v374, %v897
        %v1048 = vadd.f32 %v375, %v902
        %v1049 = vadd.f32 %v376, %v905
        %v1050 = vadd.f32 %v377, %v910
        %v1051 = vadd.f32 %v378, %v913
        %v1052 = vadd.f32 %v379, %v918
        %v1053 = vadd.f32 %v380, %v921
        %v1054 = vadd.f32 %v381, %v926
        %v1055 = vadd.f32 %v382, %v929
        %v1056 = vadd.f32 %v383, %v934
        %v1057 = vadd.f32 %v384, %v937
        %v1058 = vadd.f32 %v385, %v942
        %v1059 = vadd.f32 %v386, %v945
        %v1060 = vadd.f32 %v387, %v950
        %v1061 = vadd.f32 %v388, %v953
        %v1062 = vadd.f32 %v389, %v958
        %v1063 = vadd.f32 %v390, %v961
        %v1064 = vadd.f32 %v391, %v966
        %v1065 = vadd.f32 %v392, %v969
        %v1066 = vadd.f32 %v393, %v974
        %v1067 = vadd.f32 %v394, %v977
        %v1068 = vadd.f32 %v395, %v982
        %v1069 = vadd.f32 %v396, %v985
        %v1070 = vadd.f32 %v397, %v990
        %v1071 = vadd.f32 %v398, %v993
        %v1072 = vadd.f32 %v399, %v998
        %v1073 = vadd.f32 %v400, %v1001
        %v1074 = vadd.f32 %v401, %v1006
        %v1075 = vadd.f32 %v402, %v1009
        %vm1076 = vcmask 261120
        %1077 = vst.msk [vmem:[#allocation2] sm:$0xff] %vm1076, %v1012
        %1078 = vst.msk [vmem:[#allocation2 + $0x8] sm:$0xff] %vm1076, %v1013
        %1079 = vst.msk [vmem:[#allocation2 + $0x10] sm:$0xff] %vm1076, %v1014
        %1080 = vst.msk [vmem:[#allocation2 + $0x18] sm:$0xff] %vm1076, %v1015
        %1081 = vst.msk [vmem:[#allocation2 + $0x20] sm:$0xff] %vm1076, %v1016
        %1082 = vst.msk [vmem:[#allocation2 + $0x28] sm:$0xff] %vm1076, %v1017
        %1083 = vst.msk [vmem:[#allocation2 + $0x30] sm:$0xff] %vm1076, %v1018
        %1084 = vst.msk [vmem:[#allocation2 + $0x38] sm:$0xff] %vm1076, %v1019
        %1085 = vst.msk [vmem:[#allocation2 + $0x40] sm:$0xff] %vm1076, %v1020
        %1086 = vst.msk [vmem:[#allocation2 + $0x48] sm:$0xff] %vm1076, %v1021
        %1087 = vst.msk [vmem:[#allocation2 + $0x50] sm:$0xff] %vm1076, %v1022
        %1088 = vst.msk [vmem:[#allocation2 + $0x58] sm:$0xff] %vm1076, %v1023
        %1089 = vst.msk [vmem:[#allocation2 + $0x60] sm:$0xff] %vm1076, %v1024
        %1090 = vst.msk [vmem:[#allocation2 + $0x68] sm:$0xff] %vm1076, %v1025
        %1091 = vst.msk [vmem:[#allocation2 + $0x70] sm:$0xff] %vm1076, %v1026
        %1092 = vst.msk [vmem:[#allocation2 + $0x78] sm:$0xff] %vm1076, %v1027
        %1093 = vst.msk [vmem:[#allocation2 + $0x80] sm:$0xff] %vm1076, %v1028
        %1094 = vst.msk [vmem:[#allocation2 + $0x88] sm:$0xff] %vm1076, %v1029
        %1095 = vst.msk [vmem:[#allocation2 + $0x90] sm:$0xff] %vm1076, %v1030
        %1096 = vst.msk [vmem:[#allocation2 + $0x98] sm:$0xff] %vm1076, %v1031
        %1097 = vst.msk [vmem:[#allocation2 + $0xa0] sm:$0xff] %vm1076, %v1032
        %1098 = vst.msk [vmem:[#allocation2 + $0xa8] sm:$0xff] %vm1076, %v1033
        %1099 = vst.msk [vmem:[#allocation2 + $0xb0] sm:$0xff] %vm1076, %v1034
        %1100 = vst.msk [vmem:[#allocation2 + $0xb8] sm:$0xff] %vm1076, %v1035
        %1101 = vst.msk [vmem:[#allocation2 + $0xc0] sm:$0xff] %vm1076, %v1036
        %1102 = vst.msk [vmem:[#allocation2 + $0xc8] sm:$0xff] %vm1076, %v1037
        %1103 = vst.msk [vmem:[#allocation2 + $0xd0] sm:$0xff] %vm1076, %v1038
        %1104 = vst.msk [vmem:[#allocation2 + $0xd8] sm:$0xff] %vm1076, %v1039
        %1105 = vst.msk [vmem:[#allocation2 + $0xe0] sm:$0xff] %vm1076, %v1040
        %1106 = vst.msk [vmem:[#allocation2 + $0xe8] sm:$0xff] %vm1076, %v1041
        %1107 = vst.msk [vmem:[#allocation2 + $0xf0] sm:$0xff] %vm1076, %v1042
        %1108 = vst.msk [vmem:[#allocation2 + $0xf8] sm:$0xff] %vm1076, %v1043
        %1109 = vst.msk [vmem:[#allocation2 + $0x100] sm:$0xff] %vm1076, %v1044
        %1110 = vst.msk [vmem:[#allocation2 + $0x108] sm:$0xff] %vm1076, %v1045
        %1111 = vst.msk [vmem:[#allocation2 + $0x110] sm:$0xff] %vm1076, %v1046
        %1112 = vst.msk [vmem:[#allocation2 + $0x118] sm:$0xff] %vm1076, %v1047
        %1113 = vst.msk [vmem:[#allocation2 + $0x120] sm:$0xff] %vm1076, %v1048
        %1114 = vst.msk [vmem:[#allocation2 + $0x128] sm:$0xff] %vm1076, %v1049
        %1115 = vst.msk [vmem:[#allocation2 + $0x130] sm:$0xff] %vm1076, %v1050
        %1116 = vst.msk [vmem:[#allocation2 + $0x138] sm:$0xff] %vm1076, %v1051
        %1117 = vst.msk [vmem:[#allocation2 + $0x140] sm:$0xff] %vm1076, %v1052
        %1118 = vst.msk [vmem:[#allocation2 + $0x148] sm:$0xff] %vm1076, %v1053
        %1119 = vst.msk [vmem:[#allocation2 + $0x150] sm:$0xff] %vm1076, %v1054
        %1120 = vst.msk [vmem:[#allocation2 + $0x158] sm:$0xff] %vm1076, %v1055
        %1121 = vst.msk [vmem:[#allocation2 + $0x160] sm:$0xff] %vm1076, %v1056
        %1122 = vst.msk [vmem:[#allocation2 + $0x168] sm:$0xff] %vm1076, %v1057
        %1123 = vst.msk [vmem:[#allocation2 + $0x170] sm:$0xff] %vm1076, %v1058
        %1124 = vst.msk [vmem:[#allocation2 + $0x178] sm:$0xff] %vm1076, %v1059
        %1125 = vst.msk [vmem:[#allocation2 + $0x180] sm:$0xff] %vm1076, %v1060
        %1126 = vst.msk [vmem:[#allocation2 + $0x188] sm:$0xff] %vm1076, %v1061
        %1127 = vst.msk [vmem:[#allocation2 + $0x190] sm:$0xff] %vm1076, %v1062
        %1128 = vst.msk [vmem:[#allocation2 + $0x198] sm:$0xff] %vm1076, %v1063
        %1129 = vst.msk [vmem:[#allocation2 + $0x1a0] sm:$0xff] %vm1076, %v1064
        %1130 = vst.msk [vmem:[#allocation2 + $0x1a8] sm:$0xff] %vm1076, %v1065
        %1131 = vst.msk [vmem:[#allocation2 + $0x1b0] sm:$0xff] %vm1076, %v1066
        %1132 = vst.msk [vmem:[#allocation2 + $0x1b8] sm:$0xff] %vm1076, %v1067
        %1133 = vst.msk [vmem:[#allocation2 + $0x1c0] sm:$0xff] %vm1076, %v1068
        %1134 = vst.msk [vmem:[#allocation2 + $0x1c8] sm:$0xff] %vm1076, %v1069
        %1135 = vst.msk [vmem:[#allocation2 + $0x1d0] sm:$0xff] %vm1076, %v1070
        %1136 = vst.msk [vmem:[#allocation2 + $0x1d8] sm:$0xff] %vm1076, %v1071
        %1137 = vst.msk [vmem:[#allocation2 + $0x1e0] sm:$0xff] %vm1076, %v1072
        %1138 = vst.msk [vmem:[#allocation2 + $0x1e8] sm:$0xff] %vm1076, %v1073
        %1139 = vst.msk [vmem:[#allocation2 + $0x1f0] sm:$0xff] %vm1076, %v1074
        %1140 = vst.msk [vmem:[#allocation2 + $0x1f8] sm:$0xff] %vm1076, %v1075
        // Predicated region
        $region37: #{tpu_custom_call.1} parent=27 // pred_check
          %p1141 = pneg %p270
        $region38: #{tpu_custom_call.1} parent=27 // pred_check_branch
          %1143 = sbr.rel (%p1141) target = $region40
        $region39: #{tpu_custom_call.1} parent=27 // pred_region
          %v1144 = vld [vmem:[#allocation2] sm:$0xff]
          %v1145 = vld [vmem:[#allocation2 + $0x8] sm:$0xff]
          %v1146 = vld [vmem:[#allocation2 + $0x10] sm:$0xff]
          %v1147 = vld [vmem:[#allocation2 + $0x18] sm:$0xff]
          %v1148 = vld [vmem:[#allocation2 + $0x20] sm:$0xff]
          %v1149 = vld [vmem:[#allocation2 + $0x28] sm:$0xff]
          %v1150 = vld [vmem:[#allocation2 + $0x30] sm:$0xff]
          %v1151 = vld [vmem:[#allocation2 + $0x38] sm:$0xff]
          %v1152 = vld [vmem:[#allocation2 + $0x40] sm:$0xff]
          %v1153 = vld [vmem:[#allocation2 + $0x48] sm:$0xff]
          %v1154 = vld [vmem:[#allocation2 + $0x50] sm:$0xff]
          %v1155 = vld [vmem:[#allocation2 + $0x58] sm:$0xff]
          %v1156 = vld [vmem:[#allocation2 + $0x60] sm:$0xff]
          %v1157 = vld [vmem:[#allocation2 + $0x68] sm:$0xff]
          %v1158 = vld [vmem:[#allocation2 + $0x70] sm:$0xff]
          %v1159 = vld [vmem:[#allocation2 + $0x78] sm:$0xff]
          %v1160 = vld [vmem:[#allocation2 + $0x80] sm:$0xff]
          %v1161 = vld [vmem:[#allocation2 + $0x88] sm:$0xff]
          %v1162 = vld [vmem:[#allocation2 + $0x90] sm:$0xff]
          %v1163 = vld [vmem:[#allocation2 + $0x98] sm:$0xff]
          %v1164 = vld [vmem:[#allocation2 + $0xa0] sm:$0xff]
          %v1165 = vld [vmem:[#allocation2 + $0xa8] sm:$0xff]
          %v1166 = vld [vmem:[#allocation2 + $0xb0] sm:$0xff]
          %v1167 = vld [vmem:[#allocation2 + $0xb8] sm:$0xff]
          %v1168 = vld [vmem:[#allocation2 + $0xc0] sm:$0xff]
          %v1169 = vld [vmem:[#allocation2 + $0xc8] sm:$0xff]
          %v1170 = vld [vmem:[#allocation2 + $0xd0] sm:$0xff]
          %v1171 = vld [vmem:[#allocation2 + $0xd8] sm:$0xff]
          %v1172 = vld [vmem:[#allocation2 + $0xe0] sm:$0xff]
          %v1173 = vld [vmem:[#allocation2 + $0xe8] sm:$0xff]
          %v1174 = vld [vmem:[#allocation2 + $0xf0] sm:$0xff]
          %v1175 = vld [vmem:[#allocation2 + $0xf8] sm:$0xff]
          %v1176 = vld [vmem:[#allocation2 + $0x100] sm:$0xff]
          %v1177 = vld [vmem:[#allocation2 + $0x108] sm:$0xff]
          %v1178 = vld [vmem:[#allocation2 + $0x110] sm:$0xff]
          %v1179 = vld [vmem:[#allocation2 + $0x118] sm:$0xff]
          %v1180 = vld [vmem:[#allocation2 + $0x120] sm:$0xff]
          %v1181 = vld [vmem:[#allocation2 + $0x128] sm:$0xff]
          %v1182 = vld [vmem:[#allocation2 + $0x130] sm:$0xff]
          %v1183 = vld [vmem:[#allocation2 + $0x138] sm:$0xff]
          %v1184 = vld [vmem:[#allocation2 + $0x140] sm:$0xff]
          %v1185 = vld [vmem:[#allocation2 + $0x148] sm:$0xff]
          %v1186 = vld [vmem:[#allocation2 + $0x150] sm:$0xff]
          %v1187 = vld [vmem:[#allocation2 + $0x158] sm:$0xff]
          %v1188 = vld [vmem:[#allocation2 + $0x160] sm:$0xff]
          %v1189 = vld [vmem:[#allocation2 + $0x168] sm:$0xff]
          %v1190 = vld [vmem:[#allocation2 + $0x170] sm:$0xff]
          %v1191 = vld [vmem:[#allocation2 + $0x178] sm:$0xff]
          %v1192 = vld [vmem:[#allocation2 + $0x180] sm:$0xff]
          %v1193 = vld [vmem:[#allocation2 + $0x188] sm:$0xff]
          %v1194 = vld [vmem:[#allocation2 + $0x190] sm:$0xff]
          %v1195 = vld [vmem:[#allocation2 + $0x198] sm:$0xff]
          %v1196 = vld [vmem:[#allocation2 + $0x1a0] sm:$0xff]
          %v1197 = vld [vmem:[#allocation2 + $0x1a8] sm:$0xff]
          %v1198 = vld [vmem:[#allocation2 + $0x1b0] sm:$0xff]
          %v1199 = vld [vmem:[#allocation2 + $0x1b8] sm:$0xff]
          %v1200 = vld [vmem:[#allocation2 + $0x1c0] sm:$0xff]
          %v1201 = vld [vmem:[#allocation2 + $0x1c8] sm:$0xff]
          %v1202 = vld [vmem:[#allocation2 + $0x1d0] sm:$0xff]
          %v1203 = vld [vmem:[#allocation2 + $0x1d8] sm:$0xff]
          %v1204 = vld [vmem:[#allocation2 + $0x1e0] sm:$0xff]
          %v1205 = vld [vmem:[#allocation2 + $0x1e8] sm:$0xff]
          %v1206 = vld [vmem:[#allocation2 + $0x1f0] sm:$0xff]
          %v1207 = vld [vmem:[#allocation2 + $0x1f8] sm:$0xff]
          %v1208 = vpack.c.bf16 %v1145, %v1144
          %v1209 = vpack.c.bf16 %v1147, %v1146
          %v1210 = vpack.c.bf16 %v1149, %v1148
          %v1211 = vpack.c.bf16 %v1151, %v1150
          %v1212 = vpack.c.bf16 %v1153, %v1152
          %v1213 = vpack.c.bf16 %v1155, %v1154
          %v1214 = vpack.c.bf16 %v1157, %v1156
          %v1215 = vpack.c.bf16 %v1159, %v1158
          %v1216 = vpack.c.bf16 %v1161, %v1160
          %v1217 = vpack.c.bf16 %v1163, %v1162
          %v1218 = vpack.c.bf16 %v1165, %v1164
          %v1219 = vpack.c.bf16 %v1167, %v1166
          %v1220 = vpack.c.bf16 %v1169, %v1168
          %v1221 = vpack.c.bf16 %v1171, %v1170
          %v1222 = vpack.c.bf16 %v1173, %v1172
          %v1223 = vpack.c.bf16 %v1175, %v1174
          %v1224 = vpack.c.bf16 %v1177, %v1176
          %v1225 = vpack.c.bf16 %v1179, %v1178
          %v1226 = vpack.c.bf16 %v1181, %v1180
          %v1227 = vpack.c.bf16 %v1183, %v1182
          %v1228 = vpack.c.bf16 %v1185, %v1184
          %v1229 = vpack.c.bf16 %v1187, %v1186
          %v1230 = vpack.c.bf16 %v1189, %v1188
          %v1231 = vpack.c.bf16 %v1191, %v1190
          %v1232 = vpack.c.bf16 %v1193, %v1192
          %v1233 = vpack.c.bf16 %v1195, %v1194
          %v1234 = vpack.c.bf16 %v1197, %v1196
          %v1235 = vpack.c.bf16 %v1199, %v1198
          %v1236 = vpack.c.bf16 %v1201, %v1200
          %v1237 = vpack.c.bf16 %v1203, %v1202
          %v1238 = vpack.c.bf16 %v1205, %v1204
          %v1239 = vpack.c.bf16 %v1207, %v1206
          %v1272 = vunpack.c.l.b16 %v1208
          %v1273 = vunpack.c.h.b16 %v1208
          %v1274 = vunpack.c.l.b16 %v1209
          %v1275 = vunpack.c.h.b16 %v1209
          %v1276 = vunpack.c.l.b16 %v1210
          %v1277 = vunpack.c.h.b16 %v1210
          %v1278 = vunpack.c.l.b16 %v1211
          %v1279 = vunpack.c.h.b16 %v1211
          %v1280 = vunpack.c.l.b16 %v1212
          %v1281 = vunpack.c.h.b16 %v1212
          %v1282 = vunpack.c.l.b16 %v1213
          %v1283 = vunpack.c.h.b16 %v1213
          %v1284 = vunpack.c.l.b16 %v1214
          %v1285 = vunpack.c.h.b16 %v1214
          %v1286 = vunpack.c.l.b16 %v1215
          %v1287 = vunpack.c.h.b16 %v1215
          %v1288 = vunpack.c.l.b16 %v1216
          %v1289 = vunpack.c.h.b16 %v1216
          %v1290 = vunpack.c.l.b16 %v1217
          %v1291 = vunpack.c.h.b16 %v1217
          %v1292 = vunpack.c.l.b16 %v1218
          %v1293 = vunpack.c.h.b16 %v1218
          %v1294 = vunpack.c.l.b16 %v1219
          %v1295 = vunpack.c.h.b16 %v1219
          %v1296 = vunpack.c.l.b16 %v1220
          %v1297 = vunpack.c.h.b16 %v1220
          %v1298 = vunpack.c.l.b16 %v1221
          %v1299 = vunpack.c.h.b16 %v1221
          %v1300 = vunpack.c.l.b16 %v1222
          %v1301 = vunpack.c.h.b16 %v1222
          %v1302 = vunpack.c.l.b16 %v1223
          %v1303 = vunpack.c.h.b16 %v1223
          %v1304 = vunpack.c.l.b16 %v1224
          %v1305 = vunpack.c.h.b16 %v1224
          %v1306 = vunpack.c.l.b16 %v1225
          %v1307 = vunpack.c.h.b16 %v1225
          %v1308 = vunpack.c.l.b16 %v1226
          %v1309 = vunpack.c.h.b16 %v1226
          %v1310 = vunpack.c.l.b16 %v1227
          %v1311 = vunpack.c.h.b16 %v1227
          %v1312 = vunpack.c.l.b16 %v1228
          %v1313 = vunpack.c.h.b16 %v1228
          %v1314 = vunpack.c.l.b16 %v1229
          %v1315 = vunpack.c.h.b16 %v1229
          %v1316 = vunpack.c.l.b16 %v1230
          %v1317 = vunpack.c.h.b16 %v1230
          %v1318 = vunpack.c.l.b16 %v1231
          %v1319 = vunpack.c.h.b16 %v1231
          %v1320 = vunpack.c.l.b16 %v1232
          %v1321 = vunpack.c.h.b16 %v1232
          %v1322 = vunpack.c.l.b16 %v1233
          %v1323 = vunpack.c.h.b16 %v1233
          %v1324 = vunpack.c.l.b16 %v1234
          %v1325 = vunpack.c.h.b16 %v1234
          %v1326 = vunpack.c.l.b16 %v1235
          %v1327 = vunpack.c.h.b16 %v1235
          %v1328 = vunpack.c.l.b16 %v1236
          %v1329 = vunpack.c.h.b16 %v1236
          %v1330 = vunpack.c.l.b16 %v1237
          %v1331 = vunpack.c.h.b16 %v1237
          %v1332 = vunpack.c.l.b16 %v1238
          %v1333 = vunpack.c.h.b16 %v1238
          %v1334 = vunpack.c.l.b16 %v1239
          %v1335 = vunpack.c.h.b16 %v1239
          %v1336 = vpack.c.b16 %v1272, %v1272
          %v1337 = vpack.c.b16 %v1273, %v1273
          %v1338 = vpack.c.b16 %v1274, %v1274
          %v1339 = vpack.c.b16 %v1275, %v1275
          %v1340 = vpack.c.b16 %v1276, %v1276
          %v1341 = vpack.c.b16 %v1277, %v1277
          %v1342 = vpack.c.b16 %v1278, %v1278
          %v1343 = vpack.c.b16 %v1279, %v1279
          %v1344 = vpack.c.b16 %v1280, %v1280
          %v1345 = vpack.c.b16 %v1281, %v1281
          %v1346 = vpack.c.b16 %v1282, %v1282
          %v1347 = vpack.c.b16 %v1283, %v1283
          %v1348 = vpack.c.b16 %v1284, %v1284
          %v1349 = vpack.c.b16 %v1285, %v1285
          %v1350 = vpack.c.b16 %v1286, %v1286
          %v1351 = vpack.c.b16 %v1287, %v1287
          %v1352 = vpack.c.b16 %v1288, %v1288
          %v1353 = vpack.c.b16 %v1289, %v1289
          %v1354 = vpack.c.b16 %v1290, %v1290
          %v1355 = vpack.c.b16 %v1291, %v1291
          %v1356 = vpack.c.b16 %v1292, %v1292
          %v1357 = vpack.c.b16 %v1293, %v1293
          %v1358 = vpack.c.b16 %v1294, %v1294
          %v1359 = vpack.c.b16 %v1295, %v1295
          %v1360 = vpack.c.b16 %v1296, %v1296
          %v1361 = vpack.c.b16 %v1297, %v1297
          %v1362 = vpack.c.b16 %v1298, %v1298
          %v1363 = vpack.c.b16 %v1299, %v1299
          %v1364 = vpack.c.b16 %v1300, %v1300
          %v1365 = vpack.c.b16 %v1301, %v1301
          %v1366 = vpack.c.b16 %v1302, %v1302
          %v1367 = vpack.c.b16 %v1303, %v1303
          %v1368 = vpack.c.b16 %v1304, %v1304
          %v1369 = vpack.c.b16 %v1305, %v1305
          %v1370 = vpack.c.b16 %v1306, %v1306
          %v1371 = vpack.c.b16 %v1307, %v1307
          %v1372 = vpack.c.b16 %v1308, %v1308
          %v1373 = vpack.c.b16 %v1309, %v1309
          %v1374 = vpack.c.b16 %v1310, %v1310
          %v1375 = vpack.c.b16 %v1311, %v1311
          %v1376 = vpack.c.b16 %v1312, %v1312
          %v1377 = vpack.c.b16 %v1313, %v1313
          %v1378 = vpack.c.b16 %v1314, %v1314
          %v1379 = vpack.c.b16 %v1315, %v1315
          %v1380 = vpack.c.b16 %v1316, %v1316
          %v1381 = vpack.c.b16 %v1317, %v1317
          %v1382 = vpack.c.b16 %v1318, %v1318
          %v1383 = vpack.c.b16 %v1319, %v1319
          %v1384 = vpack.c.b16 %v1320, %v1320
          %v1385 = vpack.c.b16 %v1321, %v1321
          %v1386 = vpack.c.b16 %v1322, %v1322
          %v1387 = vpack.c.b16 %v1323, %v1323
          %v1388 = vpack.c.b16 %v1324, %v1324
          %v1389 = vpack.c.b16 %v1325, %v1325
          %v1390 = vpack.c.b16 %v1326, %v1326
          %v1391 = vpack.c.b16 %v1327, %v1327
          %v1392 = vpack.c.b16 %v1328, %v1328
          %v1393 = vpack.c.b16 %v1329, %v1329
          %v1394 = vpack.c.b16 %v1330, %v1330
          %v1395 = vpack.c.b16 %v1331, %v1331
          %v1396 = vpack.c.b16 %v1332, %v1332
          %v1397 = vpack.c.b16 %v1333, %v1333
          %v1398 = vpack.c.b16 %v1334, %v1334
          %v1399 = vpack.c.b16 %v1335, %v1335
          %vm1464 = vcmask 257024
          %1465 = vst.msk [vmem:[%s267] sm:$0xf] %vm1464, %v1336
          %1466 = vst.msk [vmem:[%s267 + $0x4] sm:$0xf] %vm1464, %v1337
          %1467 = vst.msk [vmem:[%s267 + $0x8] sm:$0xf] %vm1464, %v1338
          %1468 = vst.msk [vmem:[%s267 + $0xc] sm:$0xf] %vm1464, %v1339
          %1469 = vst.msk [vmem:[%s267 + $0x10] sm:$0xf] %vm1464, %v1340
          %1470 = vst.msk [vmem:[%s267 + $0x14] sm:$0xf] %vm1464, %v1341
          %1471 = vst.msk [vmem:[%s267 + $0x18] sm:$0xf] %vm1464, %v1342
          %1472 = vst.msk [vmem:[%s267 + $0x1c] sm:$0xf] %vm1464, %v1343
          %1473 = vst.msk [vmem:[%s267 + $0x20] sm:$0xf] %vm1464, %v1344
          %1474 = vst.msk [vmem:[%s267 + $0x24] sm:$0xf] %vm1464, %v1345
          %1475 = vst.msk [vmem:[%s267 + $0x28] sm:$0xf] %vm1464, %v1346
          %1476 = vst.msk [vmem:[%s267 + $0x2c] sm:$0xf] %vm1464, %v1347
          %1477 = vst.msk [vmem:[%s267 + $0x30] sm:$0xf] %vm1464, %v1348
          %1478 = vst.msk [vmem:[%s267 + $0x34] sm:$0xf] %vm1464, %v1349
          %1479 = vst.msk [vmem:[%s267 + $0x38] sm:$0xf] %vm1464, %v1350
          %1480 = vst.msk [vmem:[%s267 + $0x3c] sm:$0xf] %vm1464, %v1351
          %1481 = vst.msk [vmem:[%s267 + $0x40] sm:$0xf] %vm1464, %v1352
          %1482 = vst.msk [vmem:[%s267 + $0x44] sm:$0xf] %vm1464, %v1353
          %1483 = vst.msk [vmem:[%s267 + $0x48] sm:$0xf] %vm1464, %v1354
          %1484 = vst.msk [vmem:[%s267 + $0x4c] sm:$0xf] %vm1464, %v1355
          %1485 = vst.msk [vmem:[%s267 + $0x50] sm:$0xf] %vm1464, %v1356
          %1486 = vst.msk [vmem:[%s267 + $0x54] sm:$0xf] %vm1464, %v1357
          %1487 = vst.msk [vmem:[%s267 + $0x58] sm:$0xf] %vm1464, %v1358
          %1488 = vst.msk [vmem:[%s267 + $0x5c] sm:$0xf] %vm1464, %v1359
          %1489 = vst.msk [vmem:[%s267 + $0x60] sm:$0xf] %vm1464, %v1360
          %1490 = vst.msk [vmem:[%s267 + $0x64] sm:$0xf] %vm1464, %v1361
          %1491 = vst.msk [vmem:[%s267 + $0x68] sm:$0xf] %vm1464, %v1362
          %1492 = vst.msk [vmem:[%s267 + $0x6c] sm:$0xf] %vm1464, %v1363
          %1493 = vst.msk [vmem:[%s267 + $0x70] sm:$0xf] %vm1464, %v1364
          %1494 = vst.msk [vmem:[%s267 + $0x74] sm:$0xf] %vm1464, %v1365
          %1495 = vst.msk [vmem:[%s267 + $0x78] sm:$0xf] %vm1464, %v1366
          %1496 = vst.msk [vmem:[%s267 + $0x7c] sm:$0xf] %vm1464, %v1367
          %1497 = vst.msk [vmem:[%s267 + $0x80] sm:$0xf] %vm1464, %v1368
          %1498 = vst.msk [vmem:[%s267 + $0x84] sm:$0xf] %vm1464, %v1369
          %1499 = vst.msk [vmem:[%s267 + $0x88] sm:$0xf] %vm1464, %v1370
          %1500 = vst.msk [vmem:[%s267 + $0x8c] sm:$0xf] %vm1464, %v1371
          %1501 = vst.msk [vmem:[%s267 + $0x90] sm:$0xf] %vm1464, %v1372
          %1502 = vst.msk [vmem:[%s267 + $0x94] sm:$0xf] %vm1464, %v1373
          %1503 = vst.msk [vmem:[%s267 + $0x98] sm:$0xf] %vm1464, %v1374
          %1504 = vst.msk [vmem:[%s267 + $0x9c] sm:$0xf] %vm1464, %v1375
          %1505 = vst.msk [vmem:[%s267 + $0xa0] sm:$0xf] %vm1464, %v1376
          %1506 = vst.msk [vmem:[%s267 + $0xa4] sm:$0xf] %vm1464, %v1377
          %1507 = vst.msk [vmem:[%s267 + $0xa8] sm:$0xf] %vm1464, %v1378
          %1508 = vst.msk [vmem:[%s267 + $0xac] sm:$0xf] %vm1464, %v1379
          %1509 = vst.msk [vmem:[%s267 + $0xb0] sm:$0xf] %vm1464, %v1380
          %1510 = vst.msk [vmem:[%s267 + $0xb4] sm:$0xf] %vm1464, %v1381
          %1511 = vst.msk [vmem:[%s267 + $0xb8] sm:$0xf] %vm1464, %v1382
          %1512 = vst.msk [vmem:[%s267 + $0xbc] sm:$0xf] %vm1464, %v1383
          %1513 = vst.msk [vmem:[%s267 + $0xc0] sm:$0xf] %vm1464, %v1384
          %1514 = vst.msk [vmem:[%s267 + $0xc4] sm:$0xf] %vm1464, %v1385
          %1515 = vst.msk [vmem:[%s267 + $0xc8] sm:$0xf] %vm1464, %v1386
          %1516 = vst.msk [vmem:[%s267 + $0xcc] sm:$0xf] %vm1464, %v1387
          %1517 = vst.msk [vmem:[%s267 + $0xd0] sm:$0xf] %vm1464, %v1388
          %1518 = vst.msk [vmem:[%s267 + $0xd4] sm:$0xf] %vm1464, %v1389
          %1519 = vst.msk [vmem:[%s267 + $0xd8] sm:$0xf] %vm1464, %v1390
          %1520 = vst.msk [vmem:[%s267 + $0xdc] sm:$0xf] %vm1464, %v1391
          %1521 = vst.msk [vmem:[%s267 + $0xe0] sm:$0xf] %vm1464, %v1392
          %1522 = vst.msk [vmem:[%s267 + $0xe4] sm:$0xf] %vm1464, %v1393
          %1523 = vst.msk [vmem:[%s267 + $0xe8] sm:$0xf] %vm1464, %v1394
          %1524 = vst.msk [vmem:[%s267 + $0xec] sm:$0xf] %vm1464, %v1395
          %1525 = vst.msk [vmem:[%s267 + $0xf0] sm:$0xf] %vm1464, %v1396
          %1526 = vst.msk [vmem:[%s267 + $0xf4] sm:$0xf] %vm1464, %v1397
          %1527 = vst.msk [vmem:[%s267 + $0xf8] sm:$0xf] %vm1464, %v1398
          %1528 = vst.msk [vmem:[%s267 + $0xfc] sm:$0xf] %vm1464, %v1399
          %v1529 = vsel %vm1076, %v1144, 0.0
          %v1530 = vsel %vm1076, %v1145, 0.0
          %v1531 = vadd.f32 %v1529, %v1530
          %v1532 = vsel %vm1076, %v1146, 0.0
          %v1533 = vadd.f32 %v1531, %v1532
          %v1534 = vsel %vm1076, %v1147, 0.0
          %v1535 = vadd.f32 %v1533, %v1534
          %v1536 = vsel %vm1076, %v1148, 0.0
          %v1537 = vadd.f32 %v1535, %v1536
          %v1538 = vsel %vm1076, %v1149, 0.0
          %v1539 = vadd.f32 %v1537, %v1538
          %v1540 = vsel %vm1076, %v1150, 0.0
          %v1541 = vadd.f32 %v1539, %v1540
          %v1542 = vsel %vm1076, %v1151, 0.0
          %v1543 = vadd.f32 %v1541, %v1542
          %v1544 = vsel %vm1076, %v1152, 0.0
          %v1545 = vadd.f32 %v1543, %v1544
          %v1546 = vsel %vm1076, %v1153, 0.0
          %v1547 = vadd.f32 %v1545, %v1546
          %v1548 = vsel %vm1076, %v1154, 0.0
          %v1549 = vadd.f32 %v1547, %v1548
          %v1550 = vsel %vm1076, %v1155, 0.0
          %v1551 = vadd.f32 %v1549, %v1550
          %v1552 = vsel %vm1076, %v1156, 0.0
          %v1553 = vadd.f32 %v1551, %v1552
          %v1554 = vsel %vm1076, %v1157, 0.0
          %v1555 = vadd.f32 %v1553, %v1554
          %v1556 = vsel %vm1076, %v1158, 0.0
          %v1557 = vadd.f32 %v1555, %v1556
          %v1558 = vsel %vm1076, %v1159, 0.0
          %v1559 = vadd.f32 %v1557, %v1558
          %v1560 = vsel %vm1076, %v1160, 0.0
          %v1561 = vadd.f32 %v1559, %v1560
          %v1562 = vsel %vm1076, %v1161, 0.0
          %v1563 = vadd.f32 %v1561, %v1562
          %v1564 = vsel %vm1076, %v1162, 0.0
          %v1565 = vadd.f32 %v1563, %v1564
          %v1566 = vsel %vm1076, %v1163, 0.0
          %v1567 = vadd.f32 %v1565, %v1566
          %v1568 = vsel %vm1076, %v1164, 0.0
          %v1569 = vadd.f32 %v1567, %v1568
          %v1570 = vsel %vm1076, %v1165, 0.0
          %v1571 = vadd.f32 %v1569, %v1570
          %v1572 = vsel %vm1076, %v1166, 0.0
          %v1573 = vadd.f32 %v1571, %v1572
          %v1574 = vsel %vm1076, %v1167, 0.0
          %v1575 = vadd.f32 %v1573, %v1574
          %v1576 = vsel %vm1076, %v1168, 0.0
          %v1577 = vadd.f32 %v1575, %v1576
          %v1578 = vsel %vm1076, %v1169, 0.0
          %v1579 = vadd.f32 %v1577, %v1578
          %v1580 = vsel %vm1076, %v1170, 0.0
          %v1581 = vadd.f32 %v1579, %v1580
          %v1582 = vsel %vm1076, %v1171, 0.0
          %v1583 = vadd.f32 %v1581, %v1582
          %v1584 = vsel %vm1076, %v1172, 0.0
          %v1585 = vadd.f32 %v1583, %v1584
          %v1586 = vsel %vm1076, %v1173, 0.0
          %v1587 = vadd.f32 %v1585, %v1586
          %v1588 = vsel %vm1076, %v1174, 0.0
          %v1589 = vadd.f32 %v1587, %v1588
          %v1590 = vsel %vm1076, %v1175, 0.0
          %v1591 = vadd.f32 %v1589, %v1590
          %v1592 = vsel %vm1076, %v1176, 0.0
          %v1593 = vadd.f32 %v1591, %v1592
          %v1594 = vsel %vm1076, %v1177, 0.0
          %v1595 = vadd.f32 %v1593, %v1594
          %v1596 = vsel %vm1076, %v1178, 0.0
          %v1597 = vadd.f32 %v1595, %v1596
          %v1598 = vsel %vm1076, %v1179, 0.0
          %v1599 = vadd.f32 %v1597, %v1598
          %v1600 = vsel %vm1076, %v1180, 0.0
          %v1601 = vadd.f32 %v1599, %v1600
          %v1602 = vsel %vm1076, %v1181, 0.0
          %v1603 = vadd.f32 %v1601, %v1602
          %v1604 = vsel %vm1076, %v1182, 0.0
          %v1605 = vadd.f32 %v1603, %v1604
          %v1606 = vsel %vm1076, %v1183, 0.0
          %v1607 = vadd.f32 %v1605, %v1606
          %v1608 = vsel %vm1076, %v1184, 0.0
          %v1609 = vadd.f32 %v1607, %v1608
          %v1610 = vsel %vm1076, %v1185, 0.0
          %v1611 = vadd.f32 %v1609, %v1610
          %v1612 = vsel %vm1076, %v1186, 0.0
          %v1613 = vadd.f32 %v1611, %v1612
          %v1614 = vsel %vm1076, %v1187, 0.0
          %v1615 = vadd.f32 %v1613, %v1614
          %v1616 = vsel %vm1076, %v1188, 0.0
          %v1617 = vadd.f32 %v1615, %v1616
          %v1618 = vsel %vm1076, %v1189, 0.0
          %v1619 = vadd.f32 %v1617, %v1618
          %v1620 = vsel %vm1076, %v1190, 0.0
          %v1621 = vadd.f32 %v1619, %v1620
          %v1622 = vsel %vm1076, %v1191, 0.0
          %v1623 = vadd.f32 %v1621, %v1622
          %v1624 = vsel %vm1076, %v1192, 0.0
          %v1625 = vadd.f32 %v1623, %v1624
          %v1626 = vsel %vm1076, %v1193, 0.0
          %v1627 = vadd.f32 %v1625, %v1626
          %v1628 = vsel %vm1076, %v1194, 0.0
          %v1629 = vadd.f32 %v1627, %v1628
          %v1630 = vsel %vm1076, %v1195, 0.0
          %v1631 = vadd.f32 %v1629, %v1630
          %v1632 = vsel %vm1076, %v1196, 0.0
          %v1633 = vadd.f32 %v1631, %v1632
          %v1634 = vsel %vm1076, %v1197, 0.0
          %v1635 = vadd.f32 %v1633, %v1634
          %v1636 = vsel %vm1076, %v1198, 0.0
          %v1637 = vadd.f32 %v1635, %v1636
          %v1638 = vsel %vm1076, %v1199, 0.0
          %v1639 = vadd.f32 %v1637, %v1638
          %v1640 = vsel %vm1076, %v1200, 0.0
          %v1641 = vadd.f32 %v1639, %v1640
          %v1642 = vsel %vm1076, %v1201, 0.0
          %v1643 = vadd.f32 %v1641, %v1642
          %v1644 = vsel %vm1076, %v1202, 0.0
          %v1645 = vadd.f32 %v1643, %v1644
          %v1646 = vsel %vm1076, %v1203, 0.0
          %v1647 = vadd.f32 %v1645, %v1646
          %v1648 = vsel %vm1076, %v1204, 0.0
          %v1649 = vadd.f32 %v1647, %v1648
          %v1650 = vsel %vm1076, %v1205, 0.0
          %v1651 = vadd.f32 %v1649, %v1650
          %v1652 = vsel %vm1076, %v1206, 0.0
          %v1653 = vadd.f32 %v1651, %v1652
          %v1654 = vsel %vm1076, %v1207, 0.0
          %v1655 = vadd.f32 %v1653, %v1654
          %v1656 = vrot.slane %v1655, 4
          %v1657 = vadd.f32 %v1655, %v1656
          %v1658 = vrot.slane %v1657, 2
          %v1659 = vadd.f32 %v1657, %v1658
          %v1660 = vrot.slane %v1659, 1
          %v1661 = vadd.f32 %v1659, %v1660
          %v1662 = vmul.f32 %v1144, %v1144
          %v1663 = vmul.f32 %v1145, %v1145
          %v1664 = vmul.f32 %v1146, %v1146
          %v1665 = vmul.f32 %v1147, %v1147
          %v1666 = vmul.f32 %v1148, %v1148
          %v1667 = vmul.f32 %v1149, %v1149
          %v1668 = vmul.f32 %v1150, %v1150
          %v1669 = vmul.f32 %v1151, %v1151
          %v1670 = vmul.f32 %v1152, %v1152
          %v1671 = vmul.f32 %v1153, %v1153
          %v1672 = vmul.f32 %v1154, %v1154
          %v1673 = vmul.f32 %v1155, %v1155
          %v1674 = vmul.f32 %v1156, %v1156
          %v1675 = vmul.f32 %v1157, %v1157
          %v1676 = vmul.f32 %v1158, %v1158
          %v1677 = vmul.f32 %v1159, %v1159
          %v1678 = vmul.f32 %v1160, %v1160
          %v1679 = vmul.f32 %v1161, %v1161
          %v1680 = vmul.f32 %v1162, %v1162
          %v1681 = vmul.f32 %v1163, %v1163
          %v1682 = vmul.f32 %v1164, %v1164
          %v1683 = vmul.f32 %v1165, %v1165
          %v1684 = vmul.f32 %v1166, %v1166
          %v1685 = vmul.f32 %v1167, %v1167
          %v1686 = vmul.f32 %v1168, %v1168
          %v1687 = vmul.f32 %v1169, %v1169
          %v1688 = vmul.f32 %v1170, %v1170
          %v1689 = vmul.f32 %v1171, %v1171
          %v1690 = vmul.f32 %v1172, %v1172
          %v1691 = vmul.f32 %v1173, %v1173
          %v1692 = vmul.f32 %v1174, %v1174
          %v1693 = vmul.f32 %v1175, %v1175
          %v1694 = vmul.f32 %v1176, %v1176
          %v1695 = vmul.f32 %v1177, %v1177
          %v1696 = vmul.f32 %v1178, %v1178
          %v1697 = vmul.f32 %v1179, %v1179
          %v1698 = vmul.f32 %v1180, %v1180
          %v1699 = vmul.f32 %v1181, %v1181
          %v1700 = vmul.f32 %v1182, %v1182
          %v1701 = vmul.f32 %v1183, %v1183
          %v1702 = vmul.f32 %v1184, %v1184
          %v1703 = vmul.f32 %v1185, %v1185
          %v1704 = vmul.f32 %v1186, %v1186
          %v1705 = vmul.f32 %v1187, %v1187
          %v1706 = vmul.f32 %v1188, %v1188
          %v1707 = vmul.f32 %v1189, %v1189
          %v1708 = vmul.f32 %v1190, %v1190
          %v1709 = vmul.f32 %v1191, %v1191
          %v1710 = vmul.f32 %v1192, %v1192
          %v1711 = vmul.f32 %v1193, %v1193
          %v1712 = vmul.f32 %v1194, %v1194
          %v1713 = vmul.f32 %v1195, %v1195
          %v1714 = vmul.f32 %v1196, %v1196
          %v1715 = vmul.f32 %v1197, %v1197
          %v1716 = vmul.f32 %v1198, %v1198
          %v1717 = vmul.f32 %v1199, %v1199
          %v1718 = vmul.f32 %v1200, %v1200
          %v1719 = vmul.f32 %v1201, %v1201
          %v1720 = vmul.f32 %v1202, %v1202
          %v1721 = vmul.f32 %v1203, %v1203
          %v1722 = vmul.f32 %v1204, %v1204
          %v1723 = vmul.f32 %v1205, %v1205
          %v1724 = vmul.f32 %v1206, %v1206
          %v1725 = vmul.f32 %v1207, %v1207
          %v1726 = vsel %vm1076, %v1662, 0.0
          %v1727 = vsel %vm1076, %v1663, 0.0
          %v1728 = vadd.f32 %v1726, %v1727
          %v1729 = vsel %vm1076, %v1664, 0.0
          %v1730 = vadd.f32 %v1728, %v1729
          %v1731 = vsel %vm1076, %v1665, 0.0
          %v1732 = vadd.f32 %v1730, %v1731
          %v1733 = vsel %vm1076, %v1666, 0.0
          %v1734 = vadd.f32 %v1732, %v1733
          %v1735 = vsel %vm1076, %v1667, 0.0
          %v1736 = vadd.f32 %v1734, %v1735
          %v1737 = vsel %vm1076, %v1668, 0.0
          %v1738 = vadd.f32 %v1736, %v1737
          %v1739 = vsel %vm1076, %v1669, 0.0
          %v1740 = vadd.f32 %v1738, %v1739
          %v1741 = vsel %vm1076, %v1670, 0.0
          %v1742 = vadd.f32 %v1740, %v1741
          %v1743 = vsel %vm1076, %v1671, 0.0
          %v1744 = vadd.f32 %v1742, %v1743
          %v1745 = vsel %vm1076, %v1672, 0.0
          %v1746 = vadd.f32 %v1744, %v1745
          %v1747 = vsel %vm1076, %v1673, 0.0
          %v1748 = vadd.f32 %v1746, %v1747
          %v1749 = vsel %vm1076, %v1674, 0.0
          %v1750 = vadd.f32 %v1748, %v1749
          %v1751 = vsel %vm1076, %v1675, 0.0
          %v1752 = vadd.f32 %v1750, %v1751
          %v1753 = vsel %vm1076, %v1676, 0.0
          %v1754 = vadd.f32 %v1752, %v1753
          %v1755 = vsel %vm1076, %v1677, 0.0
          %v1756 = vadd.f32 %v1754, %v1755
          %v1757 = vsel %vm1076, %v1678, 0.0
          %v1758 = vadd.f32 %v1756, %v1757
          %v1759 = vsel %vm1076, %v1679, 0.0
          %v1760 = vadd.f32 %v1758, %v1759
          %v1761 = vsel %vm1076, %v1680, 0.0
          %v1762 = vadd.f32 %v1760, %v1761
          %v1763 = vsel %vm1076, %v1681, 0.0
          %v1764 = vadd.f32 %v1762, %v1763
          %v1765 = vsel %vm1076, %v1682, 0.0
          %v1766 = vadd.f32 %v1764, %v1765
          %v1767 = vsel %vm1076, %v1683, 0.0
          %v1768 = vadd.f32 %v1766, %v1767
          %v1769 = vsel %vm1076, %v1684, 0.0
          %v1770 = vadd.f32 %v1768, %v1769
          %v1771 = vsel %vm1076, %v1685, 0.0
          %v1772 = vadd.f32 %v1770, %v1771
          %v1773 = vsel %vm1076, %v1686, 0.0
          %v1774 = vadd.f32 %v1772, %v1773
          %v1775 = vsel %vm1076, %v1687, 0.0
          %v1776 = vadd.f32 %v1774, %v1775
          %v1777 = vsel %vm1076, %v1688, 0.0
          %v1778 = vadd.f32 %v1776, %v1777
          %v1779 = vsel %vm1076, %v1689, 0.0
          %v1780 = vadd.f32 %v1778, %v1779
          %v1781 = vsel %vm1076, %v1690, 0.0
          %v1782 = vadd.f32 %v1780, %v1781
          %v1783 = vsel %vm1076, %v1691, 0.0
          %v1784 = vadd.f32 %v1782, %v1783
          %v1785 = vsel %vm1076, %v1692, 0.0
          %v1786 = vadd.f32 %v1784, %v1785
          %v1787 = vsel %vm1076, %v1693, 0.0
          %v1788 = vadd.f32 %v1786, %v1787
          %v1789 = vsel %vm1076, %v1694, 0.0
          %v1790 = vadd.f32 %v1788, %v1789
          %v1791 = vsel %vm1076, %v1695, 0.0
          %v1792 = vadd.f32 %v1790, %v1791
          %v1793 = vsel %vm1076, %v1696, 0.0
          %v1794 = vadd.f32 %v1792, %v1793
          %v1795 = vsel %vm1076, %v1697, 0.0
          %v1796 = vadd.f32 %v1794, %v1795
          %v1797 = vsel %vm1076, %v1698, 0.0
          %v1798 = vadd.f32 %v1796, %v1797
          %v1799 = vsel %vm1076, %v1699, 0.0
          %v1800 = vadd.f32 %v1798, %v1799
          %v1801 = vsel %vm1076, %v1700, 0.0
          %v1802 = vadd.f32 %v1800, %v1801
          %v1803 = vsel %vm1076, %v1701, 0.0
          %v1804 = vadd.f32 %v1802, %v1803
          %v1805 = vsel %vm1076, %v1702, 0.0
          %v1806 = vadd.f32 %v1804, %v1805
          %v1807 = vsel %vm1076, %v1703, 0.0
          %v1808 = vadd.f32 %v1806, %v1807
          %v1809 = vsel %vm1076, %v1704, 0.0
          %v1810 = vadd.f32 %v1808, %v1809
          %v1811 = vsel %vm1076, %v1705, 0.0
          %v1812 = vadd.f32 %v1810, %v1811
          %v1813 = vsel %vm1076, %v1706, 0.0
          %v1814 = vadd.f32 %v1812, %v1813
          %v1815 = vsel %vm1076, %v1707, 0.0
          %v1816 = vadd.f32 %v1814, %v1815
          %v1817 = vsel %vm1076, %v1708, 0.0
          %v1818 = vadd.f32 %v1816, %v1817
          %v1819 = vsel %vm1076, %v1709, 0.0
          %v1820 = vadd.f32 %v1818, %v1819
          %v1821 = vsel %vm1076, %v1710, 0.0
          %v1822 = vadd.f32 %v1820, %v1821
          %v1823 = vsel %vm1076, %v1711, 0.0
          %v1824 = vadd.f32 %v1822, %v1823
          %v1825 = vsel %vm1076, %v1712, 0.0
          %v1826 = vadd.f32 %v1824, %v1825
          %v1827 = vsel %vm1076, %v1713, 0.0
          %v1828 = vadd.f32 %v1826, %v1827
          %v1829 = vsel %vm1076, %v1714, 0.0
          %v1830 = vadd.f32 %v1828, %v1829
          %v1831 = vsel %vm1076, %v1715, 0.0
          %v1832 = vadd.f32 %v1830, %v1831
          %v1833 = vsel %vm1076, %v1716, 0.0
          %v1834 = vadd.f32 %v1832, %v1833
          %v1835 = vsel %vm1076, %v1717, 0.0
          %v1836 = vadd.f32 %v1834, %v1835
          %v1837 = vsel %vm1076, %v1718, 0.0
          %v1838 = vadd.f32 %v1836, %v1837
          %v1839 = vsel %vm1076, %v1719, 0.0
          %v1840 = vadd.f32 %v1838, %v1839
          %v1841 = vsel %vm1076, %v1720, 0.0
          %v1842 = vadd.f32 %v1840, %v1841
          %v1843 = vsel %vm1076, %v1721, 0.0
          %v1844 = vadd.f32 %v1842, %v1843
          %v1845 = vsel %vm1076, %v1722, 0.0
          %v1846 = vadd.f32 %v1844, %v1845
          %v1847 = vsel %vm1076, %v1723, 0.0
          %v1848 = vadd.f32 %v1846, %v1847
          %v1849 = vsel %vm1076, %v1724, 0.0
          %v1850 = vadd.f32 %v1848, %v1849
          %v1851 = vsel %vm1076, %v1725, 0.0
          %v1852 = vadd.f32 %v1850, %v1851
          %v1853 = vrot.slane %v1852, 4
          %v1854 = vadd.f32 %v1852, %v1853
          %v1855 = vrot.slane %v1854, 2
          %v1856 = vadd.f32 %v1854, %v1855
          %v1857 = vrot.slane %v1856, 1
          %v1858 = vadd.f32 %v1856, %v1857
          %vm1859 = vcmask 1040384
          %v1860 = vsel %vm1859, %v1661, %v1858
          %vm1861 = vcmask 254976
          %1862 = vst.msk [vmem:[%s249] sm:$0x3] %vm1861, %v1860
        $region40: #{tpu_custom_call.1} parent=27 // pred_fallthru
          _
        %s1863 = smul.u32 64, %s26
        %p1864 = scmp.lt.s32.totalorder %s1863, 255
        %s1865 = scalar_select %p1864, %s1863, 255
        %p1866 = scmp.lt.s32.totalorder %s27, 0
        %s1867 = scalar_select %p1866, %s27, 0
        %s1868 = sadd.s32 %s1867, %s1865
        %s1869 = smul.addr %s1868, 4
        %s1870 = scalar_lea.vmem %s2, %s1869
        %s1871 = sand.u32 %s134, 1
        %s1872 = scalar_lea.sflag [#allocation5], %s1871
        %s1873 = sand.u32 %s134, 1
        %s1874 = smul.addr %s1873, 2
        %s1875 = scalar_lea.vmem [#allocation6], %s1874
        // Predicated region
        $region41: #{tpu_custom_call.1} parent=27 // pred_check
          %p1876 = pneg %p116
        $region42: #{tpu_custom_call.1} parent=27 // pred_check_branch
          %1878 = sbr.rel (%p1876) target = $region44
        $region43: #{tpu_custom_call.1} parent=27 // pred_region
          %s1879 = smul.u32 64, %s26
        $region44: #{tpu_custom_call.1} parent=27 // pred_fallthru
          _
        // Predicated region
        $region45: #{tpu_custom_call.1} parent=27 // pred_check
          %p1880 = pneg %p144
        $region46: #{tpu_custom_call.1} parent=27 // pred_check_branch
          %1882 = sbr.rel (%p1880) target = $region48
        $region47: #{tpu_custom_call.1} parent=27 // pred_region
          %s1884 = ssub.s32 32, 32
          %1885 = vsyncadd %s1872, %s1884
          %s1886 = sadd.s32 %s27, %s26
          %s1887 = smul.addr %s1886, 32
          %s1888 = scalar_lea.hbm %s3, %s1887
          %s1890 = sshll.u32 %s1875, 4
          %s1891 = int_to_ptr.vmem [resolvable:$true] %s1890
          %1893 = dma.vmem_to_hbm [thread:$0]  %s1891, 32, %s1888, %s1872
        $region48: #{tpu_custom_call.1} parent=27 // pred_fallthru
          _
      $region28: #{tpu_custom_call.1} parent=5 // pred_fallthru
        _
      %p1894 = scmp.le.s32.totalorder 2, %s16
      // Predicated region
      $region49: #{tpu_custom_call.1} parent=5 // pred_check
        %p1895 = pneg %p1894
      $region50: #{tpu_custom_call.1} parent=5 // pred_check_branch
        %1897 = sbr.rel (%p1895) target = $region52
      $region51: #{tpu_custom_call.1} parent=5 // pred_region
        %s1898 = ssub.s32 %s16, 2
        // Predicated region
        $region53: #{tpu_custom_call.1} parent=51 // pred_check
          %p1899 = pneg %p122
        $region54: #{tpu_custom_call.1} parent=51 // pred_check_branch
          %1901 = sbr.rel (%p1899) target = $region56
        $region55: #{tpu_custom_call.1} parent=51 // pred_region
          %s1902 = smul.u32 64, %s29
          %p1903 = scmp.lt.s32.totalorder %s1902, 255
          %s1904 = scalar_select %p1903, %s1902, 255
          %p1905 = scmp.lt.s32.totalorder %s30, 0
          %s1906 = scalar_select %p1905, %s30, 0
          %s1907 = sadd.s32 %s1906, %s1904
          %s1908 = smul.addr %s1907, 4
          %s1909 = scalar_lea.vmem %s2, %s1908
        $region56: #{tpu_custom_call.1} parent=51 // pred_fallthru
          _
        // Predicated region
        $region57: #{tpu_custom_call.1} parent=51 // pred_check
          %p1910 = pneg %p150
        $region58: #{tpu_custom_call.1} parent=51 // pred_check_branch
          %1912 = sbr.rel (%p1910) target = $region60
        $region59: #{tpu_custom_call.1} parent=51 // pred_region
          %s1913 = sand.u32 %s135, 1
          %s1914 = scalar_lea.sflag [#allocation5], %s1913
          %s1915 = sand.u32 %s135, 1
          %s1916 = smul.addr %s1915, 2
          %s1917 = scalar_lea.vmem [#allocation6], %s1916
          %1918 = dma.done %s1914, 32
        $region60: #{tpu_custom_call.1} parent=51 // pred_fallthru
          _
      $region52: #{tpu_custom_call.1} parent=5 // pred_fallthru
        _
    $region6: #{tpu_custom_call.1} parent=1 // loop_footer
      %s20 = sadd.s32 1, %s16
    $region7: #{tpu_custom_call.1} parent=1 // loop_footer_branch
      %15 = sbr.rel target = $region3
    $region8: #{tpu_custom_call.1} parent=1 // loop_exit
      _
    %1919 = vsyncpa [#allocation4], 1
    %s1920 = scalar_lea.sflag [#allocation4], 1
    %1921 = vsyncpa %s1920, 1
    %1922 = vsyncpa [#allocation5], 1
    %s1923 = scalar_lea.sflag [#allocation5], 1
    %1924 = vsyncpa %s1923, 1

</llo_original>
